<compile_context>
chip_gen: v7x
topology: tpu7x:2x2x1
jax: 0.10.0
libtpu: 0.0.40
codegen_flags: <defaults>
</compile_context>

<pallas_src>
import math

import jax
import jax.numpy as jnp
from jax.experimental import pallas as pl
from jax.experimental.pallas import tpu as pltpu


# Conv configs from the module declaration.
# conv2d_0: Conv2d(4, 2, (1, 3), stride=(2, 1), padding=[[0, 0], [1, 1]])
CONV0 = dict(Co=2, KH=1, KW=3, sh=2, ph=0, pw=1)
# conv2d_1: Conv2d(4, 6, 2, stride=(3, 1), padding=1)
CONV1 = dict(Co=6, KH=2, KW=2, sh=3, ph=1, pw=1)


def _out_hw(h, w, cfg):
    oh = (h + 2 * cfg["ph"] - cfg["KH"]) // cfg["sh"] + 1
    ow = (w + 2 * cfg["pw"] - cfg["KW"]) // 1 + 1      # width stride is 1
    return oh, ow


# ----------------------------------------------------------------------------
# Direct conv on register-resident data.
#   src: dict {(h, w): (Ci, N) jnp value}.  Returns ({(oh, ow): (Co, N)}, OH, OW).
# Static Python loops; padding taps skipped at compile time; Co and N vectorized
# inside each vreg slab; bias-initialized accumulator; weight columns and source
# channel rows hoisted/memoized so they are loaded/sliced once per conv call.
# ----------------------------------------------------------------------------
def _conv_stage(src, Hin, Win, Ci, N, w_ref, b_ref, cfg):
    Co, KH, KW, sh, ph, pw = (cfg["Co"], cfg["KH"], cfg["KW"],
                              cfg["sh"], cfg["ph"], cfg["pw"])
    OH = (Hin + 2 * ph - KH) // sh + 1
    OW = (Win + 2 * pw - KW) + 1

    bias = jnp.broadcast_to(b_ref[...], (Co, N))       # hoisted broadcast bias

    wcols = {}

    def wcol(kh, kw, ci):                               # (Co, 1) weight column
        key = (kh, kw, ci)
        if key not in wcols:
            wcols[key] = w_ref[kh, kw, ci]
        return wcols[key]

    rows = {}

    def srow(h, w, ci):                                 # (1, N) source channel row
        key = (h, w, ci)
        if key not in rows:
            rows[key] = src[(h, w)][ci:ci + 1, :]
        return rows[key]

    out = {}
    for oh in range(OH):
        for ow in range(OW):
            acc = bias                                  # bias-initialized accumulator
            for kh in range(KH):
                ih = oh * sh + kh - ph
                if not 0 <= ih < Hin:
                    continue                            # compile-time padding-tap skip
                for kw in range(KW):
                    iw = ow + kw - pw
                    if not 0 <= iw < Win:
                        continue
                    for ci in range(Ci):
                        # (Co,1) * (1,N) -> (Co,N): all output channels & batch per op
                        acc = acc + wcol(kh, kw, ci) * srow(ih, iw, ci)
            out[(oh, ow)] = acc
    return out, OH, OW


# ----------------------------------------------------------------------------
# One fused kernel: conv chain + elementwise tail + channel concat.
# ----------------------------------------------------------------------------
def _fused_kernel(x_ref, w0_ref, b0_ref, w1_ref, b1_ref,
                  w02_ref, b02_ref, w06_ref, b06_ref, o_ref):
    Hx, Wx, Cx, N = x_ref.shape

    # Input as register-resident (C, N) slabs -- no scratch, no padded buffers.
    xsrc = {(h, w): x_ref[h, w] for h in range(Hx) for w in range(Wx)}

    # v1 = conv2d_0(x1); v2 = conv2d_1(x1)
    v1, h1, w1 = _conv_stage(xsrc, Hx, Wx, Cx, N, w0_ref, b0_ref, CONV0)
    v2, h2, w2 = _conv_stage(xsrc, Hx, Wx, Cx, N, w1_ref, b1_ref, CONV1)
    # TODO(synk): conv2d_0 declares in_channels=4 but is applied to 2-/6-channel
    # tensors below; channel-adapted weight copies (same config) are used there.
    v3, h3, w3 = _conv_stage(v1, h1, w1, 2, N, w02_ref, b02_ref, CONV0)   # conv2d_0(v1)
    v4, h4, w4 = _conv_stage(v2, h2, w2, 6, N, w06_ref, b06_ref, CONV0)   # conv2d_0(v2)
    v5, h5, w5 = _conv_stage(v3, h3, w3, 2, N, w02_ref, b02_ref, CONV0)   # conv2d_0(v3)
    v6, h6, w6 = _conv_stage(v4, h4, w4, 2, N, w02_ref, b02_ref, CONV0)   # conv2d_0(v4)

    # v7/v8/v9 of the original forward only feed the discarded v9 -> dead code.

    # Pack v6 and (W-broadcast) v5 into single (h6*w6*2, N) register values so the
    # whole elementwise tail runs once per op instead of once per spatial position.
    assert h5 == h6 and w5 in (1, w6), (h5, w5, h6, w6)
    v6f = jnp.concatenate([v6[(oh, ow)]
                           for oh in range(h6) for ow in range(w6)], axis=0)
    v5f = jnp.concatenate([v5[(oh, ow if w5 == w6 else 0)]
                           for oh in range(h6) for ow in range(w6)], axis=0)

    v10 = v5f * 0.044715
    v11 = v6f + v10
    v12 = v11 * 0.7978845608028654
    v13 = jnp.tanh(v12)
    v14 = v13 + 1.0
    v15 = v14 * 0.5
    v16 = v14 * v14
    # TODO(synk): original line is `v17 = v17 * v14` (v17 undefined); reconstructed as v16 * v14.
    v17 = v16 * v14
    # TODO(synk): original line is `v18 = v18 * 0.044715` (v18 undefined); reconstructed from v17.
    v18 = v17 * 0.044715
    v19 = v16 + v18
    v20 = v19 * 0.7978845608028654
    v21 = jnp.tanh(v20)
    v22 = v21 + 1.0
    v23 = v15 * v22
    v24 = v17 * v22
    v25 = v24 * 0.044715
    v26 = v23 + v25

    # torch.cat((v26, v23, v26), dim=1): one store of a dense (3*h6*w6*2, N) slab;
    # the wrapper reshapes/transposes it back to NCHW.
    o_ref[...] = jnp.concatenate([v26, v23, v26], axis=0)


# ----------------------------------------------------------------------------
# Parameters + forward wrapper (single pallas_call) + pure-JAX reference.
# ----------------------------------------------------------------------------
def init_conv(key, co, ci, kh, kw):
    # PyTorch-default-style uniform(-1/sqrt(fan_in), 1/sqrt(fan_in)) init.
    k = 1.0 / math.sqrt(ci * kh * kw)
    kwk, kbk = jax.random.split(key)
    w = jax.random.uniform(kwk, (co, ci, kh, kw), jnp.float32, -k, k)
    b = jax.random.uniform(kbk, (co,), jnp.float32, -k, k)
    return w, b


def make_params(key):
    ks = jax.random.split(key, 4)
    return {
        "c0":     init_conv(ks[0], 2, 4, 1, 3),   # conv2d_0 as declared
        "c1":     init_conv(ks[1], 6, 4, 2, 2),   # conv2d_1 as declared
        # channel-adapted copies for the in_channels-mismatched call sites
        "c0_in2": init_conv(ks[2], 2, 2, 1, 3),
        "c0_in6": init_conv(ks[3], 2, 6, 1, 3),
    }


def model_forward(x1, params):
    x = x1.astype(jnp.float32)
    N, Cx, H, W = x.shape

    h1, w1 = _out_hw(H, W, CONV0)
    h2, w2 = _out_hw(H, W, CONV1)
    h3, w3 = _out_hw(h1, w1, CONV0)
    h4, w4 = _out_hw(h2, w2, CONV0)
    h5, w5 = _out_hw(h3, w3, CONV0)
    h6, w6 = _out_hw(h4, w4, CONV0)
    # broadcast requirement of `v11 = v6 + 0.044715 * v5`
    assert h5 == h6 and (w5 == w6 or w5 == 1), (h5, w5, h6, w6)

    # Wrapper-side layout plumbing (free XLA work):
    #  * activations enter as (H, W, C, N): channel x batch in the tiled vreg dims,
    #    H/W as compile-time-unrolled leading dims,
    #  * weights enter pre-transposed as (KH, KW, Ci, Co, 1) so w_ref[kh, kw, ci]
    #    is a broadcast-ready (Co, 1) column (no in-kernel transpose/reshape).
    x_t = jnp.transpose(x, (2, 3, 1, 0))

    def prep(name):
        wgt, bias = params[name]
        return (jnp.transpose(wgt, (2, 3, 1, 0))[..., None].astype(jnp.float32),
                bias.astype(jnp.float32)[:, None])

    w0, b0 = prep("c0")
    w1c, b1 = prep("c1")
    w02, b02 = prep("c0_in2")
    w06, b06 = prep("c0_in6")

    vmem = pl.BlockSpec(memory_space=pltpu.MemorySpace.VMEM)
    out_flat = pl.pallas_call(
        _fused_kernel,
        out_shape=jax.ShapeDtypeStruct((3 * h6 * w6 * CONV0["Co"], N), jnp.float32),
        in_specs=[vmem] * 9,
        out_specs=vmem,
    )(x_t, w0, b0, w1c, b1, w02, b02, w06, b06)

    # (3, h6, w6, 2, N) -> (N, 6, h6, w6); channel order = cat(v26, v23, v26).
    out = (out_flat.reshape(3, h6, w6, CONV0["Co"], N)
           .transpose(4, 0, 3, 1, 2)
           .reshape(N, 3 * CONV0["Co"], h6, w6))
    return out


def _ref_conv(x, w, b, *, stride, pad):
    out = jax.lax.conv_general_dilated(
        x, w, window_strides=stride, padding=pad,
        dimension_numbers=("NCHW", "OIHW", "NCHW"),
        precision=jax.lax.Precision.HIGHEST)
    return out + b[None, :, None, None]


def model_reference(x1, params):
    # Pure-JAX reference of the same (repaired) forward, for correctness checking.
    x = x1.astype(jnp.float32)
    c0 = lambda t, name: _ref_conv(t, *params[name], stride=(2, 1),
                                   pad=((0, 0), (1, 1)))
    v1 = c0(x, "c0")
    v2 = _ref_conv(x, *params["c1"], stride=(3, 1), pad=((1, 1), (1, 1)))
    v3 = c0(v1, "c0_in2")
    v4 = c0(v2, "c0_in6")
    v5 = c0(v3, "c0_in2")
    v6 = c0(v4, "c0_in2")
    v10 = v5 * 0.044715
    v11 = v6 + v10
    v12 = v11 * 0.7978845608028654
    v13 = jnp.tanh(v12)
    v14 = v13 + 1.0
    v15 = v14 * 0.5
    v16 = v14 * v14
    v17 = v16 * v14
    v18 = v17 * 0.044715
    v19 = v16 + v18
    v20 = v19 * 0.7978845608028654
    v21 = jnp.tanh(v20)
    v22 = v21 + 1.0
    v23 = v15 * v22
    v24 = v17 * v22
    v25 = v24 * 0.044715
    v26 = v23 + v25
    return jnp.concatenate([v26, v23, v26], axis=1)


if __name__ == "__main__":
    key = jax.random.PRNGKey(0)
    kx, kp = jax.random.split(key)
    # NCHW input; width=1 keeps the `v6 + 0.044715 * v5` broadcast well defined.
    x1 = jax.random.normal(kx, (2, 4, 16, 1), jnp.float32)
    params = make_params(kp)

    out = jax.jit(model_forward)(x1, params)
    jax.block_until_ready(out)
    assert out.shape == (2, 6, 2, 2), out.shape

    ref = model_reference(x1, params)
    assert jnp.allclose(out, ref, rtol=1e-3, atol=1e-5), \
        float(jnp.max(jnp.abs(out - ref)))

    print("KERNEL_OK")
</pallas_src>

<mosaic_0001>
module attributes {stable_mosaic.version = 11 : i64} {
  func.func @_fused_kernel(%arg0: memref<16x1x4x2xf32, #tpu.memory_space<vmem>>, %arg1: memref<1x3x4x2x1xf32, #tpu.memory_space<vmem>>, %arg2: memref<2x1xf32, #tpu.memory_space<vmem>>, %arg3: memref<2x2x4x6x1xf32, #tpu.memory_space<vmem>>, %arg4: memref<6x1xf32, #tpu.memory_space<vmem>>, %arg5: memref<1x3x2x2x1xf32, #tpu.memory_space<vmem>>, %arg6: memref<2x1xf32, #tpu.memory_space<vmem>>, %arg7: memref<1x3x6x2x1xf32, #tpu.memory_space<vmem>>, %arg8: memref<2x1xf32, #tpu.memory_space<vmem>>, %arg9: memref<24x2xf32, #tpu.memory_space<vmem>>) attributes {dimension_semantics = [], scalar_prefetch = 0 : i64, scratch_operands = 0 : i64, tpu.core_type = #tpu.core_type<tc>} {
    %c0 = arith.constant 0 : index
    %c0_0 = arith.constant 0 : index
    %c0_1 = arith.constant 0 : index
    %c0_2 = arith.constant 0 : index
    %0 = vector.load %arg0[%c0, %c0_0, %c0_1, %c0_2] : memref<16x1x4x2xf32, #tpu.memory_space<vmem>>, vector<1x1x4x2xf32>
    %1 = vector.shape_cast %0 : vector<1x1x4x2xf32> to vector<4x2xf32>
    %c8 = arith.constant 8 : index
    %c0_3 = arith.constant 0 : index
    %c0_4 = arith.constant 0 : index
    %c0_5 = arith.constant 0 : index
    %2 = vector.load %arg0[%c8, %c0_3, %c0_4, %c0_5] : memref<16x1x4x2xf32, #tpu.memory_space<vmem>>, vector<1x1x4x2xf32>
    %3 = vector.shape_cast %2 : vector<1x1x4x2xf32> to vector<4x2xf32>
    %c11 = arith.constant 11 : index
    %c0_6 = arith.constant 0 : index
    %c0_7 = arith.constant 0 : index
    %c0_8 = arith.constant 0 : index
    %4 = vector.load %arg0[%c11, %c0_6, %c0_7, %c0_8] : memref<16x1x4x2xf32, #tpu.memory_space<vmem>>, vector<1x1x4x2xf32>
    %5 = vector.shape_cast %4 : vector<1x1x4x2xf32> to vector<4x2xf32>
    %c12 = arith.constant 12 : index
    %c0_9 = arith.constant 0 : index
    %c0_10 = arith.constant 0 : index
    %c0_11 = arith.constant 0 : index
    %6 = vector.load %arg0[%c12, %c0_9, %c0_10, %c0_11] : memref<16x1x4x2xf32, #tpu.memory_space<vmem>>, vector<1x1x4x2xf32>
    %7 = vector.shape_cast %6 : vector<1x1x4x2xf32> to vector<4x2xf32>
    %c0_12 = arith.constant 0 : index
    %c0_13 = arith.constant 0 : index
    %8 = vector.load %arg2[%c0_12, %c0_13] : memref<2x1xf32, #tpu.memory_space<vmem>>, vector<2x1xf32>
    %9 = vector.shape_cast %8 : vector<2x1xf32> to vector<2x1xf32>
    %10 = vector.broadcast %9 : vector<2x1xf32> to vector<2x2xf32>
    %c0_14 = arith.constant 0 : index
    %c1 = arith.constant 1 : index
    %c0_15 = arith.constant 0 : index
    %c0_16 = arith.constant 0 : index
    %c0_17 = arith.constant 0 : index
    %11 = vector.load %arg1[%c0_14, %c1, %c0_15, %c0_16, %c0_17] : memref<1x3x4x2x1xf32, #tpu.memory_space<vmem>>, vector<1x1x1x2x1xf32>
    %12 = vector.shape_cast %11 : vector<1x1x1x2x1xf32> to vector<2x1xf32>
    %13 = vector.extract_strided_slice %1 {offsets = [0, 0], sizes = [1, 2], strides = [1, 1]} : vector<4x2xf32> to vector<1x2xf32>
    %14 = vector.broadcast %12 : vector<2x1xf32> to vector<2x2xf32>
    %15 = vector.broadcast %13 : vector<1x2xf32> to vector<2x2xf32>
    %16 = arith.mulf %14, %15 : vector<2x2xf32>
    %17 = arith.addf %10, %16 : vector<2x2xf32>
    %c0_18 = arith.constant 0 : index
    %c1_19 = arith.constant 1 : index
    %c1_20 = arith.constant 1 : index
    %c0_21 = arith.constant 0 : index
    %c0_22 = arith.constant 0 : index
    %18 = vector.load %arg1[%c0_18, %c1_19, %c1_20, %c0_21, %c0_22] : memref<1x3x4x2x1xf32, #tpu.memory_space<vmem>>, vector<1x1x1x2x1xf32>
    %19 = vector.shape_cast %18 : vector<1x1x1x2x1xf32> to vector<2x1xf32>
    %20 = vector.extract_strided_slice %1 {offsets = [1, 0], sizes = [1, 2], strides = [1, 1]} : vector<4x2xf32> to vector<1x2xf32>
    %21 = vector.broadcast %19 : vector<2x1xf32> to vector<2x2xf32>
    %22 = vector.broadcast %20 : vector<1x2xf32> to vector<2x2xf32>
    %23 = arith.mulf %21, %22 : vector<2x2xf32>
    %24 = arith.addf %17, %23 : vector<2x2xf32>
    %c0_23 = arith.constant 0 : index
    %c1_24 = arith.constant 1 : index
    %c2 = arith.constant 2 : index
    %c0_25 = arith.constant 0 : index
    %c0_26 = arith.constant 0 : index
    %25 = vector.load %arg1[%c0_23, %c1_24, %c2, %c0_25, %c0_26] : memref<1x3x4x2x1xf32, #tpu.memory_space<vmem>>, vector<1x1x1x2x1xf32>
    %26 = vector.shape_cast %25 : vector<1x1x1x2x1xf32> to vector<2x1xf32>
    %27 = vector.extract_strided_slice %1 {offsets = [2, 0], sizes = [1, 2], strides = [1, 1]} : vector<4x2xf32> to vector<1x2xf32>
    %28 = vector.broadcast %26 : vector<2x1xf32> to vector<2x2xf32>
    %29 = vector.broadcast %27 : vector<1x2xf32> to vector<2x2xf32>
    %30 = arith.mulf %28, %29 : vector<2x2xf32>
    %31 = arith.addf %24, %30 : vector<2x2xf32>
    %c0_27 = arith.constant 0 : index
    %c1_28 = arith.constant 1 : index
    %c3 = arith.constant 3 : index
    %c0_29 = arith.constant 0 : index
    %c0_30 = arith.constant 0 : index
    %32 = vector.load %arg1[%c0_27, %c1_28, %c3, %c0_29, %c0_30] : memref<1x3x4x2x1xf32, #tpu.memory_space<vmem>>, vector<1x1x1x2x1xf32>
    %33 = vector.shape_cast %32 : vector<1x1x1x2x1xf32> to vector<2x1xf32>
    %34 = vector.extract_strided_slice %1 {offsets = [3, 0], sizes = [1, 2], strides = [1, 1]} : vector<4x2xf32> to vector<1x2xf32>
    %35 = vector.broadcast %33 : vector<2x1xf32> to vector<2x2xf32>
    %36 = vector.broadcast %34 : vector<1x2xf32> to vector<2x2xf32>
    %37 = arith.mulf %35, %36 : vector<2x2xf32>
    %38 = arith.addf %31, %37 : vector<2x2xf32>
    %39 = vector.extract_strided_slice %3 {offsets = [0, 0], sizes = [1, 2], strides = [1, 1]} : vector<4x2xf32> to vector<1x2xf32>
    %40 = vector.broadcast %12 : vector<2x1xf32> to vector<2x2xf32>
    %41 = vector.broadcast %39 : vector<1x2xf32> to vector<2x2xf32>
    %42 = arith.mulf %40, %41 : vector<2x2xf32>
    %43 = arith.addf %10, %42 : vector<2x2xf32>
    %44 = vector.extract_strided_slice %3 {offsets = [1, 0], sizes = [1, 2], strides = [1, 1]} : vector<4x2xf32> to vector<1x2xf32>
    %45 = vector.broadcast %19 : vector<2x1xf32> to vector<2x2xf32>
    %46 = vector.broadcast %44 : vector<1x2xf32> to vector<2x2xf32>
    %47 = arith.mulf %45, %46 : vector<2x2xf32>
    %48 = arith.addf %43, %47 : vector<2x2xf32>
    %49 = vector.extract_strided_slice %3 {offsets = [2, 0], sizes = [1, 2], strides = [1, 1]} : vector<4x2xf32> to vector<1x2xf32>
    %50 = vector.broadcast %26 : vector<2x1xf32> to vector<2x2xf32>
    %51 = vector.broadcast %49 : vector<1x2xf32> to vector<2x2xf32>
    %52 = arith.mulf %50, %51 : vector<2x2xf32>
    %53 = arith.addf %48, %52 : vector<2x2xf32>
    %54 = vector.extract_strided_slice %3 {offsets = [3, 0], sizes = [1, 2], strides = [1, 1]} : vector<4x2xf32> to vector<1x2xf32>
    %55 = vector.broadcast %33 : vector<2x1xf32> to vector<2x2xf32>
    %56 = vector.broadcast %54 : vector<1x2xf32> to vector<2x2xf32>
    %57 = arith.mulf %55, %56 : vector<2x2xf32>
    %58 = arith.addf %53, %57 : vector<2x2xf32>
    %c0_31 = arith.constant 0 : index
    %c0_32 = arith.constant 0 : index
    %59 = vector.load %arg4[%c0_31, %c0_32] : memref<6x1xf32, #tpu.memory_space<vmem>>, vector<6x1xf32>
    %60 = vector.shape_cast %59 : vector<6x1xf32> to vector<6x1xf32>
    %61 = vector.broadcast %60 : vector<6x1xf32> to vector<6x2xf32>
    %c1_33 = arith.constant 1 : index
    %c1_34 = arith.constant 1 : index
    %c0_35 = arith.constant 0 : index
    %c0_36 = arith.constant 0 : index
    %c0_37 = arith.constant 0 : index
    %62 = vector.load %arg3[%c1_33, %c1_34, %c0_35, %c0_36, %c0_37] : memref<2x2x4x6x1xf32, #tpu.memory_space<vmem>>, vector<1x1x1x6x1xf32>
    %63 = vector.shape_cast %62 : vector<1x1x1x6x1xf32> to vector<6x1xf32>
    %64 = vector.extract_strided_slice %1 {offsets = [0, 0], sizes = [1, 2], strides = [1, 1]} : vector<4x2xf32> to vector<1x2xf32>
    %65 = vector.broadcast %63 : vector<6x1xf32> to vector<6x2xf32>
    %66 = vector.broadcast %64 : vector<1x2xf32> to vector<6x2xf32>
    %67 = arith.mulf %65, %66 : vector<6x2xf32>
    %68 = arith.addf %61, %67 : vector<6x2xf32>
    %c1_38 = arith.constant 1 : index
    %c1_39 = arith.constant 1 : index
    %c1_40 = arith.constant 1 : index
    %c0_41 = arith.constant 0 : index
    %c0_42 = arith.constant 0 : index
    %69 = vector.load %arg3[%c1_38, %c1_39, %c1_40, %c0_41, %c0_42] : memref<2x2x4x6x1xf32, #tpu.memory_space<vmem>>, vector<1x1x1x6x1xf32>
    %70 = vector.shape_cast %69 : vector<1x1x1x6x1xf32> to vector<6x1xf32>
    %71 = vector.extract_strided_slice %1 {offsets = [1, 0], sizes = [1, 2], strides = [1, 1]} : vector<4x2xf32> to vector<1x2xf32>
    %72 = vector.broadcast %70 : vector<6x1xf32> to vector<6x2xf32>
    %73 = vector.broadcast %71 : vector<1x2xf32> to vector<6x2xf32>
    %74 = arith.mulf %72, %73 : vector<6x2xf32>
    %75 = arith.addf %68, %74 : vector<6x2xf32>
    %c1_43 = arith.constant 1 : index
    %c1_44 = arith.constant 1 : index
    %c2_45 = arith.constant 2 : index
    %c0_46 = arith.constant 0 : index
    %c0_47 = arith.constant 0 : index
    %76 = vector.load %arg3[%c1_43, %c1_44, %c2_45, %c0_46, %c0_47] : memref<2x2x4x6x1xf32, #tpu.memory_space<vmem>>, vector<1x1x1x6x1xf32>
    %77 = vector.shape_cast %76 : vector<1x1x1x6x1xf32> to vector<6x1xf32>
    %78 = vector.extract_strided_slice %1 {offsets = [2, 0], sizes = [1, 2], strides = [1, 1]} : vector<4x2xf32> to vector<1x2xf32>
    %79 = vector.broadcast %77 : vector<6x1xf32> to vector<6x2xf32>
    %80 = vector.broadcast %78 : vector<1x2xf32> to vector<6x2xf32>
    %81 = arith.mulf %79, %80 : vector<6x2xf32>
    %82 = arith.addf %75, %81 : vector<6x2xf32>
    %c1_48 = arith.constant 1 : index
    %c1_49 = arith.constant 1 : index
    %c3_50 = arith.constant 3 : index
    %c0_51 = arith.constant 0 : index
    %c0_52 = arith.constant 0 : index
    %83 = vector.load %arg3[%c1_48, %c1_49, %c3_50, %c0_51, %c0_52] : memref<2x2x4x6x1xf32, #tpu.memory_space<vmem>>, vector<1x1x1x6x1xf32>
    %84 = vector.shape_cast %83 : vector<1x1x1x6x1xf32> to vector<6x1xf32>
    %85 = vector.extract_strided_slice %1 {offsets = [3, 0], sizes = [1, 2], strides = [1, 1]} : vector<4x2xf32> to vector<1x2xf32>
    %86 = vector.broadcast %84 : vector<6x1xf32> to vector<6x2xf32>
    %87 = vector.broadcast %85 : vector<1x2xf32> to vector<6x2xf32>
    %88 = arith.mulf %86, %87 : vector<6x2xf32>
    %89 = arith.addf %82, %88 : vector<6x2xf32>
    %c1_53 = arith.constant 1 : index
    %c0_54 = arith.constant 0 : index
    %c0_55 = arith.constant 0 : index
    %c0_56 = arith.constant 0 : index
    %c0_57 = arith.constant 0 : index
    %90 = vector.load %arg3[%c1_53, %c0_54, %c0_55, %c0_56, %c0_57] : memref<2x2x4x6x1xf32, #tpu.memory_space<vmem>>, vector<1x1x1x6x1xf32>
    %91 = vector.shape_cast %90 : vector<1x1x1x6x1xf32> to vector<6x1xf32>
    %92 = vector.broadcast %91 : vector<6x1xf32> to vector<6x2xf32>
    %93 = vector.broadcast %64 : vector<1x2xf32> to vector<6x2xf32>
    %94 = arith.mulf %92, %93 : vector<6x2xf32>
    %95 = arith.addf %61, %94 : vector<6x2xf32>
    %c1_58 = arith.constant 1 : index
    %c0_59 = arith.constant 0 : index
    %c1_60 = arith.constant 1 : index
    %c0_61 = arith.constant 0 : index
    %c0_62 = arith.constant 0 : index
    %96 = vector.load %arg3[%c1_58, %c0_59, %c1_60, %c0_61, %c0_62] : memref<2x2x4x6x1xf32, #tpu.memory_space<vmem>>, vector<1x1x1x6x1xf32>
    %97 = vector.shape_cast %96 : vector<1x1x1x6x1xf32> to vector<6x1xf32>
    %98 = vector.broadcast %97 : vector<6x1xf32> to vector<6x2xf32>
    %99 = vector.broadcast %71 : vector<1x2xf32> to vector<6x2xf32>
    %100 = arith.mulf %98, %99 : vector<6x2xf32>
    %101 = arith.addf %95, %100 : vector<6x2xf32>
    %c1_63 = arith.constant 1 : index
    %c0_64 = arith.constant 0 : index
    %c2_65 = arith.constant 2 : index
    %c0_66 = arith.constant 0 : index
    %c0_67 = arith.constant 0 : index
    %102 = vector.load %arg3[%c1_63, %c0_64, %c2_65, %c0_66, %c0_67] : memref<2x2x4x6x1xf32, #tpu.memory_space<vmem>>, vector<1x1x1x6x1xf32>
    %103 = vector.shape_cast %102 : vector<1x1x1x6x1xf32> to vector<6x1xf32>
    %104 = vector.broadcast %103 : vector<6x1xf32> to vector<6x2xf32>
    %105 = vector.broadcast %78 : vector<1x2xf32> to vector<6x2xf32>
    %106 = arith.mulf %104, %105 : vector<6x2xf32>
    %107 = arith.addf %101, %106 : vector<6x2xf32>
    %c1_68 = arith.constant 1 : index
    %c0_69 = arith.constant 0 : index
    %c3_70 = arith.constant 3 : index
    %c0_71 = arith.constant 0 : index
    %c0_72 = arith.constant 0 : index
    %108 = vector.load %arg3[%c1_68, %c0_69, %c3_70, %c0_71, %c0_72] : memref<2x2x4x6x1xf32, #tpu.memory_space<vmem>>, vector<1x1x1x6x1xf32>
    %109 = vector.shape_cast %108 : vector<1x1x1x6x1xf32> to vector<6x1xf32>
    %110 = vector.broadcast %109 : vector<6x1xf32> to vector<6x2xf32>
    %111 = vector.broadcast %85 : vector<1x2xf32> to vector<6x2xf32>
    %112 = arith.mulf %110, %111 : vector<6x2xf32>
    %113 = arith.addf %107, %112 : vector<6x2xf32>
    %c0_73 = arith.constant 0 : index
    %c1_74 = arith.constant 1 : index
    %c0_75 = arith.constant 0 : index
    %c0_76 = arith.constant 0 : index
    %c0_77 = arith.constant 0 : index
    %114 = vector.load %arg3[%c0_73, %c1_74, %c0_75, %c0_76, %c0_77] : memref<2x2x4x6x1xf32, #tpu.memory_space<vmem>>, vector<1x1x1x6x1xf32>
    %115 = vector.shape_cast %114 : vector<1x1x1x6x1xf32> to vector<6x1xf32>
    %c0_78 = arith.constant 0 : index
    %c1_79 = arith.constant 1 : index
    %c1_80 = arith.constant 1 : index
    %c0_81 = arith.constant 0 : index
    %c0_82 = arith.constant 0 : index
    %116 = vector.load %arg3[%c0_78, %c1_79, %c1_80, %c0_81, %c0_82] : memref<2x2x4x6x1xf32, #tpu.memory_space<vmem>>, vector<1x1x1x6x1xf32>
    %117 = vector.shape_cast %116 : vector<1x1x1x6x1xf32> to vector<6x1xf32>
    %c0_83 = arith.constant 0 : index
    %c1_84 = arith.constant 1 : index
    %c2_85 = arith.constant 2 : index
    %c0_86 = arith.constant 0 : index
    %c0_87 = arith.constant 0 : index
    %118 = vector.load %arg3[%c0_83, %c1_84, %c2_85, %c0_86, %c0_87] : memref<2x2x4x6x1xf32, #tpu.memory_space<vmem>>, vector<1x1x1x6x1xf32>
    %119 = vector.shape_cast %118 : vector<1x1x1x6x1xf32> to vector<6x1xf32>
    %c0_88 = arith.constant 0 : index
    %c1_89 = arith.constant 1 : index
    %c3_90 = arith.constant 3 : index
    %c0_91 = arith.constant 0 : index
    %c0_92 = arith.constant 0 : index
    %120 = vector.load %arg3[%c0_88, %c1_89, %c3_90, %c0_91, %c0_92] : memref<2x2x4x6x1xf32, #tpu.memory_space<vmem>>, vector<1x1x1x6x1xf32>
    %121 = vector.shape_cast %120 : vector<1x1x1x6x1xf32> to vector<6x1xf32>
    %c0_93 = arith.constant 0 : index
    %c0_94 = arith.constant 0 : index
    %c0_95 = arith.constant 0 : index
    %c0_96 = arith.constant 0 : index
    %c0_97 = arith.constant 0 : index
    %122 = vector.load %arg3[%c0_93, %c0_94, %c0_95, %c0_96, %c0_97] : memref<2x2x4x6x1xf32, #tpu.memory_space<vmem>>, vector<1x1x1x6x1xf32>
    %123 = vector.shape_cast %122 : vector<1x1x1x6x1xf32> to vector<6x1xf32>
    %c0_98 = arith.constant 0 : index
    %c0_99 = arith.constant 0 : index
    %c1_100 = arith.constant 1 : index
    %c0_101 = arith.constant 0 : index
    %c0_102 = arith.constant 0 : index
    %124 = vector.load %arg3[%c0_98, %c0_99, %c1_100, %c0_101, %c0_102] : memref<2x2x4x6x1xf32, #tpu.memory_space<vmem>>, vector<1x1x1x6x1xf32>
    %125 = vector.shape_cast %124 : vector<1x1x1x6x1xf32> to vector<6x1xf32>
    %c0_103 = arith.constant 0 : index
    %c0_104 = arith.constant 0 : index
    %c2_105 = arith.constant 2 : index
    %c0_106 = arith.constant 0 : index
    %c0_107 = arith.constant 0 : index
    %126 = vector.load %arg3[%c0_103, %c0_104, %c2_105, %c0_106, %c0_107] : memref<2x2x4x6x1xf32, #tpu.memory_space<vmem>>, vector<1x1x1x6x1xf32>
    %127 = vector.shape_cast %126 : vector<1x1x1x6x1xf32> to vector<6x1xf32>
    %c0_108 = arith.constant 0 : index
    %c0_109 = arith.constant 0 : index
    %c3_110 = arith.constant 3 : index
    %c0_111 = arith.constant 0 : index
    %c0_112 = arith.constant 0 : index
    %128 = vector.load %arg3[%c0_108, %c0_109, %c3_110, %c0_111, %c0_112] : memref<2x2x4x6x1xf32, #tpu.memory_space<vmem>>, vector<1x1x1x6x1xf32>
    %129 = vector.shape_cast %128 : vector<1x1x1x6x1xf32> to vector<6x1xf32>
    %130 = vector.extract_strided_slice %5 {offsets = [0, 0], sizes = [1, 2], strides = [1, 1]} : vector<4x2xf32> to vector<1x2xf32>
    %131 = vector.broadcast %115 : vector<6x1xf32> to vector<6x2xf32>
    %132 = vector.broadcast %130 : vector<1x2xf32> to vector<6x2xf32>
    %133 = arith.mulf %131, %132 : vector<6x2xf32>
    %134 = arith.addf %61, %133 : vector<6x2xf32>
    %135 = vector.extract_strided_slice %5 {offsets = [1, 0], sizes = [1, 2], strides = [1, 1]} : vector<4x2xf32> to vector<1x2xf32>
    %136 = vector.broadcast %117 : vector<6x1xf32> to vector<6x2xf32>
    %137 = vector.broadcast %135 : vector<1x2xf32> to vector<6x2xf32>
    %138 = arith.mulf %136, %137 : vector<6x2xf32>
    %139 = arith.addf %134, %138 : vector<6x2xf32>
    %140 = vector.extract_strided_slice %5 {offsets = [2, 0], sizes = [1, 2], strides = [1, 1]} : vector<4x2xf32> to vector<1x2xf32>
    %141 = vector.broadcast %119 : vector<6x1xf32> to vector<6x2xf32>
    %142 = vector.broadcast %140 : vector<1x2xf32> to vector<6x2xf32>
    %143 = arith.mulf %141, %142 : vector<6x2xf32>
    %144 = arith.addf %139, %143 : vector<6x2xf32>
    %145 = vector.extract_strided_slice %5 {offsets = [3, 0], sizes = [1, 2], strides = [1, 1]} : vector<4x2xf32> to vector<1x2xf32>
    %146 = vector.broadcast %121 : vector<6x1xf32> to vector<6x2xf32>
    %147 = vector.broadcast %145 : vector<1x2xf32> to vector<6x2xf32>
    %148 = arith.mulf %146, %147 : vector<6x2xf32>
    %149 = arith.addf %144, %148 : vector<6x2xf32>
    %150 = vector.extract_strided_slice %7 {offsets = [0, 0], sizes = [1, 2], strides = [1, 1]} : vector<4x2xf32> to vector<1x2xf32>
    %151 = vector.broadcast %63 : vector<6x1xf32> to vector<6x2xf32>
    %152 = vector.broadcast %150 : vector<1x2xf32> to vector<6x2xf32>
    %153 = arith.mulf %151, %152 : vector<6x2xf32>
    %154 = arith.addf %149, %153 : vector<6x2xf32>
    %155 = vector.extract_strided_slice %7 {offsets = [1, 0], sizes = [1, 2], strides = [1, 1]} : vector<4x2xf32> to vector<1x2xf32>
    %156 = vector.broadcast %70 : vector<6x1xf32> to vector<6x2xf32>
    %157 = vector.broadcast %155 : vector<1x2xf32> to vector<6x2xf32>
    %158 = arith.mulf %156, %157 : vector<6x2xf32>
    %159 = arith.addf %154, %158 : vector<6x2xf32>
    %160 = vector.extract_strided_slice %7 {offsets = [2, 0], sizes = [1, 2], strides = [1, 1]} : vector<4x2xf32> to vector<1x2xf32>
    %161 = vector.broadcast %77 : vector<6x1xf32> to vector<6x2xf32>
    %162 = vector.broadcast %160 : vector<1x2xf32> to vector<6x2xf32>
    %163 = arith.mulf %161, %162 : vector<6x2xf32>
    %164 = arith.addf %159, %163 : vector<6x2xf32>
    %165 = vector.extract_strided_slice %7 {offsets = [3, 0], sizes = [1, 2], strides = [1, 1]} : vector<4x2xf32> to vector<1x2xf32>
    %166 = vector.broadcast %84 : vector<6x1xf32> to vector<6x2xf32>
    %167 = vector.broadcast %165 : vector<1x2xf32> to vector<6x2xf32>
    %168 = arith.mulf %166, %167 : vector<6x2xf32>
    %169 = arith.addf %164, %168 : vector<6x2xf32>
    %170 = vector.broadcast %123 : vector<6x1xf32> to vector<6x2xf32>
    %171 = vector.broadcast %130 : vector<1x2xf32> to vector<6x2xf32>
    %172 = arith.mulf %170, %171 : vector<6x2xf32>
    %173 = arith.addf %61, %172 : vector<6x2xf32>
    %174 = vector.broadcast %125 : vector<6x1xf32> to vector<6x2xf32>
    %175 = vector.broadcast %135 : vector<1x2xf32> to vector<6x2xf32>
    %176 = arith.mulf %174, %175 : vector<6x2xf32>
    %177 = arith.addf %173, %176 : vector<6x2xf32>
    %178 = vector.broadcast %127 : vector<6x1xf32> to vector<6x2xf32>
    %179 = vector.broadcast %140 : vector<1x2xf32> to vector<6x2xf32>
    %180 = arith.mulf %178, %179 : vector<6x2xf32>
    %181 = arith.addf %177, %180 : vector<6x2xf32>
    %182 = vector.broadcast %129 : vector<6x1xf32> to vector<6x2xf32>
    %183 = vector.broadcast %145 : vector<1x2xf32> to vector<6x2xf32>
    %184 = arith.mulf %182, %183 : vector<6x2xf32>
    %185 = arith.addf %181, %184 : vector<6x2xf32>
    %186 = vector.broadcast %91 : vector<6x1xf32> to vector<6x2xf32>
    %187 = vector.broadcast %150 : vector<1x2xf32> to vector<6x2xf32>
    %188 = arith.mulf %186, %187 : vector<6x2xf32>
    %189 = arith.addf %185, %188 : vector<6x2xf32>
    %190 = vector.broadcast %97 : vector<6x1xf32> to vector<6x2xf32>
    %191 = vector.broadcast %155 : vector<1x2xf32> to vector<6x2xf32>
    %192 = arith.mulf %190, %191 : vector<6x2xf32>
    %193 = arith.addf %189, %192 : vector<6x2xf32>
    %194 = vector.broadcast %103 : vector<6x1xf32> to vector<6x2xf32>
    %195 = vector.broadcast %160 : vector<1x2xf32> to vector<6x2xf32>
    %196 = arith.mulf %194, %195 : vector<6x2xf32>
    %197 = arith.addf %193, %196 : vector<6x2xf32>
    %198 = vector.broadcast %109 : vector<6x1xf32> to vector<6x2xf32>
    %199 = vector.broadcast %165 : vector<1x2xf32> to vector<6x2xf32>
    %200 = arith.mulf %198, %199 : vector<6x2xf32>
    %201 = arith.addf %197, %200 : vector<6x2xf32>
    %c0_113 = arith.constant 0 : index
    %c0_114 = arith.constant 0 : index
    %202 = vector.load %arg6[%c0_113, %c0_114] : memref<2x1xf32, #tpu.memory_space<vmem>>, vector<2x1xf32>
    %203 = vector.shape_cast %202 : vector<2x1xf32> to vector<2x1xf32>
    %204 = vector.broadcast %203 : vector<2x1xf32> to vector<2x2xf32>
    %c0_115 = arith.constant 0 : index
    %c1_116 = arith.constant 1 : index
    %c0_117 = arith.constant 0 : index
    %c0_118 = arith.constant 0 : index
    %c0_119 = arith.constant 0 : index
    %205 = vector.load %arg5[%c0_115, %c1_116, %c0_117, %c0_118, %c0_119] : memref<1x3x2x2x1xf32, #tpu.memory_space<vmem>>, vector<1x1x1x2x1xf32>
    %206 = vector.shape_cast %205 : vector<1x1x1x2x1xf32> to vector<2x1xf32>
    %207 = vector.extract_strided_slice %38 {offsets = [0, 0], sizes = [1, 2], strides = [1, 1]} : vector<2x2xf32> to vector<1x2xf32>
    %208 = vector.broadcast %206 : vector<2x1xf32> to vector<2x2xf32>
    %209 = vector.broadcast %207 : vector<1x2xf32> to vector<2x2xf32>
    %210 = arith.mulf %208, %209 : vector<2x2xf32>
    %211 = arith.addf %204, %210 : vector<2x2xf32>
    %c0_120 = arith.constant 0 : index
    %c1_121 = arith.constant 1 : index
    %c1_122 = arith.constant 1 : index
    %c0_123 = arith.constant 0 : index
    %c0_124 = arith.constant 0 : index
    %212 = vector.load %arg5[%c0_120, %c1_121, %c1_122, %c0_123, %c0_124] : memref<1x3x2x2x1xf32, #tpu.memory_space<vmem>>, vector<1x1x1x2x1xf32>
    %213 = vector.shape_cast %212 : vector<1x1x1x2x1xf32> to vector<2x1xf32>
    %214 = vector.extract_strided_slice %38 {offsets = [1, 0], sizes = [1, 2], strides = [1, 1]} : vector<2x2xf32> to vector<1x2xf32>
    %215 = vector.broadcast %213 : vector<2x1xf32> to vector<2x2xf32>
    %216 = vector.broadcast %214 : vector<1x2xf32> to vector<2x2xf32>
    %217 = arith.mulf %215, %216 : vector<2x2xf32>
    %218 = arith.addf %211, %217 : vector<2x2xf32>
    %219 = vector.extract_strided_slice %58 {offsets = [0, 0], sizes = [1, 2], strides = [1, 1]} : vector<2x2xf32> to vector<1x2xf32>
    %220 = vector.broadcast %206 : vector<2x1xf32> to vector<2x2xf32>
    %221 = vector.broadcast %219 : vector<1x2xf32> to vector<2x2xf32>
    %222 = arith.mulf %220, %221 : vector<2x2xf32>
    %223 = arith.addf %204, %222 : vector<2x2xf32>
    %224 = vector.extract_strided_slice %58 {offsets = [1, 0], sizes = [1, 2], strides = [1, 1]} : vector<2x2xf32> to vector<1x2xf32>
    %225 = vector.broadcast %213 : vector<2x1xf32> to vector<2x2xf32>
    %226 = vector.broadcast %224 : vector<1x2xf32> to vector<2x2xf32>
    %227 = arith.mulf %225, %226 : vector<2x2xf32>
    %228 = arith.addf %223, %227 : vector<2x2xf32>
    %c0_125 = arith.constant 0 : index
    %c0_126 = arith.constant 0 : index
    %229 = vector.load %arg8[%c0_125, %c0_126] : memref<2x1xf32, #tpu.memory_space<vmem>>, vector<2x1xf32>
    %230 = vector.shape_cast %229 : vector<2x1xf32> to vector<2x1xf32>
    %231 = vector.broadcast %230 : vector<2x1xf32> to vector<2x2xf32>
    %c0_127 = arith.constant 0 : index
    %c1_128 = arith.constant 1 : index
    %c0_129 = arith.constant 0 : index
    %c0_130 = arith.constant 0 : index
    %c0_131 = arith.constant 0 : index
    %232 = vector.load %arg7[%c0_127, %c1_128, %c0_129, %c0_130, %c0_131] : memref<1x3x6x2x1xf32, #tpu.memory_space<vmem>>, vector<1x1x1x2x1xf32>
    %233 = vector.shape_cast %232 : vector<1x1x1x2x1xf32> to vector<2x1xf32>
    %234 = vector.extract_strided_slice %89 {offsets = [0, 0], sizes = [1, 2], strides = [1, 1]} : vector<6x2xf32> to vector<1x2xf32>
    %235 = vector.broadcast %233 : vector<2x1xf32> to vector<2x2xf32>
    %236 = vector.broadcast %234 : vector<1x2xf32> to vector<2x2xf32>
    %237 = arith.mulf %235, %236 : vector<2x2xf32>
    %238 = arith.addf %231, %237 : vector<2x2xf32>
    %c0_132 = arith.constant 0 : index
    %c1_133 = arith.constant 1 : index
    %c1_134 = arith.constant 1 : index
    %c0_135 = arith.constant 0 : index
    %c0_136 = arith.constant 0 : index
    %239 = vector.load %arg7[%c0_132, %c1_133, %c1_134, %c0_135, %c0_136] : memref<1x3x6x2x1xf32, #tpu.memory_space<vmem>>, vector<1x1x1x2x1xf32>
    %240 = vector.shape_cast %239 : vector<1x1x1x2x1xf32> to vector<2x1xf32>
    %241 = vector.extract_strided_slice %89 {offsets = [1, 0], sizes = [1, 2], strides = [1, 1]} : vector<6x2xf32> to vector<1x2xf32>
    %242 = vector.broadcast %240 : vector<2x1xf32> to vector<2x2xf32>
    %243 = vector.broadcast %241 : vector<1x2xf32> to vector<2x2xf32>
    %244 = arith.mulf %242, %243 : vector<2x2xf32>
    %245 = arith.addf %238, %244 : vector<2x2xf32>
    %c0_137 = arith.constant 0 : index
    %c1_138 = arith.constant 1 : index
    %c2_139 = arith.constant 2 : index
    %c0_140 = arith.constant 0 : index
    %c0_141 = arith.constant 0 : index
    %246 = vector.load %arg7[%c0_137, %c1_138, %c2_139, %c0_140, %c0_141] : memref<1x3x6x2x1xf32, #tpu.memory_space<vmem>>, vector<1x1x1x2x1xf32>
    %247 = vector.shape_cast %246 : vector<1x1x1x2x1xf32> to vector<2x1xf32>
    %248 = vector.extract_strided_slice %89 {offsets = [2, 0], sizes = [1, 2], strides = [1, 1]} : vector<6x2xf32> to vector<1x2xf32>
    %249 = vector.broadcast %247 : vector<2x1xf32> to vector<2x2xf32>
    %250 = vector.broadcast %248 : vector<1x2xf32> to vector<2x2xf32>
    %251 = arith.mulf %249, %250 : vector<2x2xf32>
    %252 = arith.addf %245, %251 : vector<2x2xf32>
    %c0_142 = arith.constant 0 : index
    %c1_143 = arith.constant 1 : index
    %c3_144 = arith.constant 3 : index
    %c0_145 = arith.constant 0 : index
    %c0_146 = arith.constant 0 : index
    %253 = vector.load %arg7[%c0_142, %c1_143, %c3_144, %c0_145, %c0_146] : memref<1x3x6x2x1xf32, #tpu.memory_space<vmem>>, vector<1x1x1x2x1xf32>
    %254 = vector.shape_cast %253 : vector<1x1x1x2x1xf32> to vector<2x1xf32>
    %255 = vector.extract_strided_slice %89 {offsets = [3, 0], sizes = [1, 2], strides = [1, 1]} : vector<6x2xf32> to vector<1x2xf32>
    %256 = vector.broadcast %254 : vector<2x1xf32> to vector<2x2xf32>
    %257 = vector.broadcast %255 : vector<1x2xf32> to vector<2x2xf32>
    %258 = arith.mulf %256, %257 : vector<2x2xf32>
    %259 = arith.addf %252, %258 : vector<2x2xf32>
    %c0_147 = arith.constant 0 : index
    %c1_148 = arith.constant 1 : index
    %c4 = arith.constant 4 : index
    %c0_149 = arith.constant 0 : index
    %c0_150 = arith.constant 0 : index
    %260 = vector.load %arg7[%c0_147, %c1_148, %c4, %c0_149, %c0_150] : memref<1x3x6x2x1xf32, #tpu.memory_space<vmem>>, vector<1x1x1x2x1xf32>
    %261 = vector.shape_cast %260 : vector<1x1x1x2x1xf32> to vector<2x1xf32>
    %262 = vector.extract_strided_slice %89 {offsets = [4, 0], sizes = [1, 2], strides = [1, 1]} : vector<6x2xf32> to vector<1x2xf32>
    %263 = vector.broadcast %261 : vector<2x1xf32> to vector<2x2xf32>
    %264 = vector.broadcast %262 : vector<1x2xf32> to vector<2x2xf32>
    %265 = arith.mulf %263, %264 : vector<2x2xf32>
    %266 = arith.addf %259, %265 : vector<2x2xf32>
    %c0_151 = arith.constant 0 : index
    %c1_152 = arith.constant 1 : index
    %c5 = arith.constant 5 : index
    %c0_153 = arith.constant 0 : index
    %c0_154 = arith.constant 0 : index
    %267 = vector.load %arg7[%c0_151, %c1_152, %c5, %c0_153, %c0_154] : memref<1x3x6x2x1xf32, #tpu.memory_space<vmem>>, vector<1x1x1x2x1xf32>
    %268 = vector.shape_cast %267 : vector<1x1x1x2x1xf32> to vector<2x1xf32>
    %269 = vector.extract_strided_slice %89 {offsets = [5, 0], sizes = [1, 2], strides = [1, 1]} : vector<6x2xf32> to vector<1x2xf32>
    %270 = vector.broadcast %268 : vector<2x1xf32> to vector<2x2xf32>
    %271 = vector.broadcast %269 : vector<1x2xf32> to vector<2x2xf32>
    %272 = arith.mulf %270, %271 : vector<2x2xf32>
    %273 = arith.addf %266, %272 : vector<2x2xf32>
    %c0_155 = arith.constant 0 : index
    %c2_156 = arith.constant 2 : index
    %c0_157 = arith.constant 0 : index
    %c0_158 = arith.constant 0 : index
    %c0_159 = arith.constant 0 : index
    %274 = vector.load %arg7[%c0_155, %c2_156, %c0_157, %c0_158, %c0_159] : memref<1x3x6x2x1xf32, #tpu.memory_space<vmem>>, vector<1x1x1x2x1xf32>
    %275 = vector.shape_cast %274 : vector<1x1x1x2x1xf32> to vector<2x1xf32>
    %276 = vector.extract_strided_slice %113 {offsets = [0, 0], sizes = [1, 2], strides = [1, 1]} : vector<6x2xf32> to vector<1x2xf32>
    %277 = vector.broadcast %275 : vector<2x1xf32> to vector<2x2xf32>
    %278 = vector.broadcast %276 : vector<1x2xf32> to vector<2x2xf32>
    %279 = arith.mulf %277, %278 : vector<2x2xf32>
    %280 = arith.addf %273, %279 : vector<2x2xf32>
    %c0_160 = arith.constant 0 : index
    %c2_161 = arith.constant 2 : index
    %c1_162 = arith.constant 1 : index
    %c0_163 = arith.constant 0 : index
    %c0_164 = arith.constant 0 : index
    %281 = vector.load %arg7[%c0_160, %c2_161, %c1_162, %c0_163, %c0_164] : memref<1x3x6x2x1xf32, #tpu.memory_space<vmem>>, vector<1x1x1x2x1xf32>
    %282 = vector.shape_cast %281 : vector<1x1x1x2x1xf32> to vector<2x1xf32>
    %283 = vector.extract_strided_slice %113 {offsets = [1, 0], sizes = [1, 2], strides = [1, 1]} : vector<6x2xf32> to vector<1x2xf32>
    %284 = vector.broadcast %282 : vector<2x1xf32> to vector<2x2xf32>
    %285 = vector.broadcast %283 : vector<1x2xf32> to vector<2x2xf32>
    %286 = arith.mulf %284, %285 : vector<2x2xf32>
    %287 = arith.addf %280, %286 : vector<2x2xf32>
    %c0_165 = arith.constant 0 : index
    %c2_166 = arith.constant 2 : index
    %c2_167 = arith.constant 2 : index
    %c0_168 = arith.constant 0 : index
    %c0_169 = arith.constant 0 : index
    %288 = vector.load %arg7[%c0_165, %c2_166, %c2_167, %c0_168, %c0_169] : memref<1x3x6x2x1xf32, #tpu.memory_space<vmem>>, vector<1x1x1x2x1xf32>
    %289 = vector.shape_cast %288 : vector<1x1x1x2x1xf32> to vector<2x1xf32>
    %290 = vector.extract_strided_slice %113 {offsets = [2, 0], sizes = [1, 2], strides = [1, 1]} : vector<6x2xf32> to vector<1x2xf32>
    %291 = vector.broadcast %289 : vector<2x1xf32> to vector<2x2xf32>
    %292 = vector.broadcast %290 : vector<1x2xf32> to vector<2x2xf32>
    %293 = arith.mulf %291, %292 : vector<2x2xf32>
    %294 = arith.addf %287, %293 : vector<2x2xf32>
    %c0_170 = arith.constant 0 : index
    %c2_171 = arith.constant 2 : index
    %c3_172 = arith.constant 3 : index
    %c0_173 = arith.constant 0 : index
    %c0_174 = arith.constant 0 : index
    %295 = vector.load %arg7[%c0_170, %c2_171, %c3_172, %c0_173, %c0_174] : memref<1x3x6x2x1xf32, #tpu.memory_space<vmem>>, vector<1x1x1x2x1xf32>
    %296 = vector.shape_cast %295 : vector<1x1x1x2x1xf32> to vector<2x1xf32>
    %297 = vector.extract_strided_slice %113 {offsets = [3, 0], sizes = [1, 2], strides = [1, 1]} : vector<6x2xf32> to vector<1x2xf32>
    %298 = vector.broadcast %296 : vector<2x1xf32> to vector<2x2xf32>
    %299 = vector.broadcast %297 : vector<1x2xf32> to vector<2x2xf32>
    %300 = arith.mulf %298, %299 : vector<2x2xf32>
    %301 = arith.addf %294, %300 : vector<2x2xf32>
    %c0_175 = arith.constant 0 : index
    %c2_176 = arith.constant 2 : index
    %c4_177 = arith.constant 4 : index
    %c0_178 = arith.constant 0 : index
    %c0_179 = arith.constant 0 : index
    %302 = vector.load %arg7[%c0_175, %c2_176, %c4_177, %c0_178, %c0_179] : memref<1x3x6x2x1xf32, #tpu.memory_space<vmem>>, vector<1x1x1x2x1xf32>
    %303 = vector.shape_cast %302 : vector<1x1x1x2x1xf32> to vector<2x1xf32>
    %304 = vector.extract_strided_slice %113 {offsets = [4, 0], sizes = [1, 2], strides = [1, 1]} : vector<6x2xf32> to vector<1x2xf32>
    %305 = vector.broadcast %303 : vector<2x1xf32> to vector<2x2xf32>
    %306 = vector.broadcast %304 : vector<1x2xf32> to vector<2x2xf32>
    %307 = arith.mulf %305, %306 : vector<2x2xf32>
    %308 = arith.addf %301, %307 : vector<2x2xf32>
    %c0_180 = arith.constant 0 : index
    %c2_181 = arith.constant 2 : index
    %c5_182 = arith.constant 5 : index
    %c0_183 = arith.constant 0 : index
    %c0_184 = arith.constant 0 : index
    %309 = vector.load %arg7[%c0_180, %c2_181, %c5_182, %c0_183, %c0_184] : memref<1x3x6x2x1xf32, #tpu.memory_space<vmem>>, vector<1x1x1x2x1xf32>
    %310 = vector.shape_cast %309 : vector<1x1x1x2x1xf32> to vector<2x1xf32>
    %311 = vector.extract_strided_slice %113 {offsets = [5, 0], sizes = [1, 2], strides = [1, 1]} : vector<6x2xf32> to vector<1x2xf32>
    %312 = vector.broadcast %310 : vector<2x1xf32> to vector<2x2xf32>
    %313 = vector.broadcast %311 : vector<1x2xf32> to vector<2x2xf32>
    %314 = arith.mulf %312, %313 : vector<2x2xf32>
    %315 = arith.addf %308, %314 : vector<2x2xf32>
    %c0_185 = arith.constant 0 : index
    %c0_186 = arith.constant 0 : index
    %c0_187 = arith.constant 0 : index
    %c0_188 = arith.constant 0 : index
    %c0_189 = arith.constant 0 : index
    %316 = vector.load %arg7[%c0_185, %c0_186, %c0_187, %c0_188, %c0_189] : memref<1x3x6x2x1xf32, #tpu.memory_space<vmem>>, vector<1x1x1x2x1xf32>
    %317 = vector.shape_cast %316 : vector<1x1x1x2x1xf32> to vector<2x1xf32>
    %318 = vector.broadcast %317 : vector<2x1xf32> to vector<2x2xf32>
    %319 = vector.broadcast %234 : vector<1x2xf32> to vector<2x2xf32>
    %320 = arith.mulf %318, %319 : vector<2x2xf32>
    %321 = arith.addf %231, %320 : vector<2x2xf32>
    %c0_190 = arith.constant 0 : index
    %c0_191 = arith.constant 0 : index
    %c1_192 = arith.constant 1 : index
    %c0_193 = arith.constant 0 : index
    %c0_194 = arith.constant 0 : index
    %322 = vector.load %arg7[%c0_190, %c0_191, %c1_192, %c0_193, %c0_194] : memref<1x3x6x2x1xf32, #tpu.memory_space<vmem>>, vector<1x1x1x2x1xf32>
    %323 = vector.shape_cast %322 : vector<1x1x1x2x1xf32> to vector<2x1xf32>
    %324 = vector.broadcast %323 : vector<2x1xf32> to vector<2x2xf32>
    %325 = vector.broadcast %241 : vector<1x2xf32> to vector<2x2xf32>
    %326 = arith.mulf %324, %325 : vector<2x2xf32>
    %327 = arith.addf %321, %326 : vector<2x2xf32>
    %c0_195 = arith.constant 0 : index
    %c0_196 = arith.constant 0 : index
    %c2_197 = arith.constant 2 : index
    %c0_198 = arith.constant 0 : index
    %c0_199 = arith.constant 0 : index
    %328 = vector.load %arg7[%c0_195, %c0_196, %c2_197, %c0_198, %c0_199] : memref<1x3x6x2x1xf32, #tpu.memory_space<vmem>>, vector<1x1x1x2x1xf32>
    %329 = vector.shape_cast %328 : vector<1x1x1x2x1xf32> to vector<2x1xf32>
    %330 = vector.broadcast %329 : vector<2x1xf32> to vector<2x2xf32>
    %331 = vector.broadcast %248 : vector<1x2xf32> to vector<2x2xf32>
    %332 = arith.mulf %330, %331 : vector<2x2xf32>
    %333 = arith.addf %327, %332 : vector<2x2xf32>
    %c0_200 = arith.constant 0 : index
    %c0_201 = arith.constant 0 : index
    %c3_202 = arith.constant 3 : index
    %c0_203 = arith.constant 0 : index
    %c0_204 = arith.constant 0 : index
    %334 = vector.load %arg7[%c0_200, %c0_201, %c3_202, %c0_203, %c0_204] : memref<1x3x6x2x1xf32, #tpu.memory_space<vmem>>, vector<1x1x1x2x1xf32>
    %335 = vector.shape_cast %334 : vector<1x1x1x2x1xf32> to vector<2x1xf32>
    %336 = vector.broadcast %335 : vector<2x1xf32> to vector<2x2xf32>
    %337 = vector.broadcast %255 : vector<1x2xf32> to vector<2x2xf32>
    %338 = arith.mulf %336, %337 : vector<2x2xf32>
    %339 = arith.addf %333, %338 : vector<2x2xf32>
    %c0_205 = arith.constant 0 : index
    %c0_206 = arith.constant 0 : index
    %c4_207 = arith.constant 4 : index
    %c0_208 = arith.constant 0 : index
    %c0_209 = arith.constant 0 : index
    %340 = vector.load %arg7[%c0_205, %c0_206, %c4_207, %c0_208, %c0_209] : memref<1x3x6x2x1xf32, #tpu.memory_space<vmem>>, vector<1x1x1x2x1xf32>
    %341 = vector.shape_cast %340 : vector<1x1x1x2x1xf32> to vector<2x1xf32>
    %342 = vector.broadcast %341 : vector<2x1xf32> to vector<2x2xf32>
    %343 = vector.broadcast %262 : vector<1x2xf32> to vector<2x2xf32>
    %344 = arith.mulf %342, %343 : vector<2x2xf32>
    %345 = arith.addf %339, %344 : vector<2x2xf32>
    %c0_210 = arith.constant 0 : index
    %c0_211 = arith.constant 0 : index
    %c5_212 = arith.constant 5 : index
    %c0_213 = arith.constant 0 : index
    %c0_214 = arith.constant 0 : index
    %346 = vector.load %arg7[%c0_210, %c0_211, %c5_212, %c0_213, %c0_214] : memref<1x3x6x2x1xf32, #tpu.memory_space<vmem>>, vector<1x1x1x2x1xf32>
    %347 = vector.shape_cast %346 : vector<1x1x1x2x1xf32> to vector<2x1xf32>
    %348 = vector.broadcast %347 : vector<2x1xf32> to vector<2x2xf32>
    %349 = vector.broadcast %269 : vector<1x2xf32> to vector<2x2xf32>
    %350 = arith.mulf %348, %349 : vector<2x2xf32>
    %351 = arith.addf %345, %350 : vector<2x2xf32>
    %352 = vector.broadcast %233 : vector<2x1xf32> to vector<2x2xf32>
    %353 = vector.broadcast %276 : vector<1x2xf32> to vector<2x2xf32>
    %354 = arith.mulf %352, %353 : vector<2x2xf32>
    %355 = arith.addf %351, %354 : vector<2x2xf32>
    %356 = vector.broadcast %240 : vector<2x1xf32> to vector<2x2xf32>
    %357 = vector.broadcast %283 : vector<1x2xf32> to vector<2x2xf32>
    %358 = arith.mulf %356, %357 : vector<2x2xf32>
    %359 = arith.addf %355, %358 : vector<2x2xf32>
    %360 = vector.broadcast %247 : vector<2x1xf32> to vector<2x2xf32>
    %361 = vector.broadcast %290 : vector<1x2xf32> to vector<2x2xf32>
    %362 = arith.mulf %360, %361 : vector<2x2xf32>
    %363 = arith.addf %359, %362 : vector<2x2xf32>
    %364 = vector.broadcast %254 : vector<2x1xf32> to vector<2x2xf32>
    %365 = vector.broadcast %297 : vector<1x2xf32> to vector<2x2xf32>
    %366 = arith.mulf %364, %365 : vector<2x2xf32>
    %367 = arith.addf %363, %366 : vector<2x2xf32>
    %368 = vector.broadcast %261 : vector<2x1xf32> to vector<2x2xf32>
    %369 = vector.broadcast %304 : vector<1x2xf32> to vector<2x2xf32>
    %370 = arith.mulf %368, %369 : vector<2x2xf32>
    %371 = arith.addf %367, %370 : vector<2x2xf32>
    %372 = vector.broadcast %268 : vector<2x1xf32> to vector<2x2xf32>
    %373 = vector.broadcast %311 : vector<1x2xf32> to vector<2x2xf32>
    %374 = arith.mulf %372, %373 : vector<2x2xf32>
    %375 = arith.addf %371, %374 : vector<2x2xf32>
    %376 = vector.extract_strided_slice %169 {offsets = [0, 0], sizes = [1, 2], strides = [1, 1]} : vector<6x2xf32> to vector<1x2xf32>
    %377 = vector.broadcast %233 : vector<2x1xf32> to vector<2x2xf32>
    %378 = vector.broadcast %376 : vector<1x2xf32> to vector<2x2xf32>
    %379 = arith.mulf %377, %378 : vector<2x2xf32>
    %380 = arith.addf %231, %379 : vector<2x2xf32>
    %381 = vector.extract_strided_slice %169 {offsets = [1, 0], sizes = [1, 2], strides = [1, 1]} : vector<6x2xf32> to vector<1x2xf32>
    %382 = vector.broadcast %240 : vector<2x1xf32> to vector<2x2xf32>
    %383 = vector.broadcast %381 : vector<1x2xf32> to vector<2x2xf32>
    %384 = arith.mulf %382, %383 : vector<2x2xf32>
    %385 = arith.addf %380, %384 : vector<2x2xf32>
    %386 = vector.extract_strided_slice %169 {offsets = [2, 0], sizes = [1, 2], strides = [1, 1]} : vector<6x2xf32> to vector<1x2xf32>
    %387 = vector.broadcast %247 : vector<2x1xf32> to vector<2x2xf32>
    %388 = vector.broadcast %386 : vector<1x2xf32> to vector<2x2xf32>
    %389 = arith.mulf %387, %388 : vector<2x2xf32>
    %390 = arith.addf %385, %389 : vector<2x2xf32>
    %391 = vector.extract_strided_slice %169 {offsets = [3, 0], sizes = [1, 2], strides = [1, 1]} : vector<6x2xf32> to vector<1x2xf32>
    %392 = vector.broadcast %254 : vector<2x1xf32> to vector<2x2xf32>
    %393 = vector.broadcast %391 : vector<1x2xf32> to vector<2x2xf32>
    %394 = arith.mulf %392, %393 : vector<2x2xf32>
    %395 = arith.addf %390, %394 : vector<2x2xf32>
    %396 = vector.extract_strided_slice %169 {offsets = [4, 0], sizes = [1, 2], strides = [1, 1]} : vector<6x2xf32> to vector<1x2xf32>
    %397 = vector.broadcast %261 : vector<2x1xf32> to vector<2x2xf32>
    %398 = vector.broadcast %396 : vector<1x2xf32> to vector<2x2xf32>
    %399 = arith.mulf %397, %398 : vector<2x2xf32>
    %400 = arith.addf %395, %399 : vector<2x2xf32>
    %401 = vector.extract_strided_slice %169 {offsets = [5, 0], sizes = [1, 2], strides = [1, 1]} : vector<6x2xf32> to vector<1x2xf32>
    %402 = vector.broadcast %268 : vector<2x1xf32> to vector<2x2xf32>
    %403 = vector.broadcast %401 : vector<1x2xf32> to vector<2x2xf32>
    %404 = arith.mulf %402, %403 : vector<2x2xf32>
    %405 = arith.addf %400, %404 : vector<2x2xf32>
    %406 = vector.extract_strided_slice %201 {offsets = [0, 0], sizes = [1, 2], strides = [1, 1]} : vector<6x2xf32> to vector<1x2xf32>
    %407 = vector.broadcast %275 : vector<2x1xf32> to vector<2x2xf32>
    %408 = vector.broadcast %406 : vector<1x2xf32> to vector<2x2xf32>
    %409 = arith.mulf %407, %408 : vector<2x2xf32>
    %410 = arith.addf %405, %409 : vector<2x2xf32>
    %411 = vector.extract_strided_slice %201 {offsets = [1, 0], sizes = [1, 2], strides = [1, 1]} : vector<6x2xf32> to vector<1x2xf32>
    %412 = vector.broadcast %282 : vector<2x1xf32> to vector<2x2xf32>
    %413 = vector.broadcast %411 : vector<1x2xf32> to vector<2x2xf32>
    %414 = arith.mulf %412, %413 : vector<2x2xf32>
    %415 = arith.addf %410, %414 : vector<2x2xf32>
    %416 = vector.extract_strided_slice %201 {offsets = [2, 0], sizes = [1, 2], strides = [1, 1]} : vector<6x2xf32> to vector<1x2xf32>
    %417 = vector.broadcast %289 : vector<2x1xf32> to vector<2x2xf32>
    %418 = vector.broadcast %416 : vector<1x2xf32> to vector<2x2xf32>
    %419 = arith.mulf %417, %418 : vector<2x2xf32>
    %420 = arith.addf %415, %419 : vector<2x2xf32>
    %421 = vector.extract_strided_slice %201 {offsets = [3, 0], sizes = [1, 2], strides = [1, 1]} : vector<6x2xf32> to vector<1x2xf32>
    %422 = vector.broadcast %296 : vector<2x1xf32> to vector<2x2xf32>
    %423 = vector.broadcast %421 : vector<1x2xf32> to vector<2x2xf32>
    %424 = arith.mulf %422, %423 : vector<2x2xf32>
    %425 = arith.addf %420, %424 : vector<2x2xf32>
    %426 = vector.extract_strided_slice %201 {offsets = [4, 0], sizes = [1, 2], strides = [1, 1]} : vector<6x2xf32> to vector<1x2xf32>
    %427 = vector.broadcast %303 : vector<2x1xf32> to vector<2x2xf32>
    %428 = vector.broadcast %426 : vector<1x2xf32> to vector<2x2xf32>
    %429 = arith.mulf %427, %428 : vector<2x2xf32>
    %430 = arith.addf %425, %429 : vector<2x2xf32>
    %431 = vector.extract_strided_slice %201 {offsets = [5, 0], sizes = [1, 2], strides = [1, 1]} : vector<6x2xf32> to vector<1x2xf32>
    %432 = vector.broadcast %310 : vector<2x1xf32> to vector<2x2xf32>
    %433 = vector.broadcast %431 : vector<1x2xf32> to vector<2x2xf32>
    %434 = arith.mulf %432, %433 : vector<2x2xf32>
    %435 = arith.addf %430, %434 : vector<2x2xf32>
    %436 = vector.broadcast %317 : vector<2x1xf32> to vector<2x2xf32>
    %437 = vector.broadcast %376 : vector<1x2xf32> to vector<2x2xf32>
    %438 = arith.mulf %436, %437 : vector<2x2xf32>
    %439 = arith.addf %231, %438 : vector<2x2xf32>
    %440 = vector.broadcast %323 : vector<2x1xf32> to vector<2x2xf32>
    %441 = vector.broadcast %381 : vector<1x2xf32> to vector<2x2xf32>
    %442 = arith.mulf %440, %441 : vector<2x2xf32>
    %443 = arith.addf %439, %442 : vector<2x2xf32>
    %444 = vector.broadcast %329 : vector<2x1xf32> to vector<2x2xf32>
    %445 = vector.broadcast %386 : vector<1x2xf32> to vector<2x2xf32>
    %446 = arith.mulf %444, %445 : vector<2x2xf32>
    %447 = arith.addf %443, %446 : vector<2x2xf32>
    %448 = vector.broadcast %335 : vector<2x1xf32> to vector<2x2xf32>
    %449 = vector.broadcast %391 : vector<1x2xf32> to vector<2x2xf32>
    %450 = arith.mulf %448, %449 : vector<2x2xf32>
    %451 = arith.addf %447, %450 : vector<2x2xf32>
    %452 = vector.broadcast %341 : vector<2x1xf32> to vector<2x2xf32>
    %453 = vector.broadcast %396 : vector<1x2xf32> to vector<2x2xf32>
    %454 = arith.mulf %452, %453 : vector<2x2xf32>
    %455 = arith.addf %451, %454 : vector<2x2xf32>
    %456 = vector.broadcast %347 : vector<2x1xf32> to vector<2x2xf32>
    %457 = vector.broadcast %401 : vector<1x2xf32> to vector<2x2xf32>
    %458 = arith.mulf %456, %457 : vector<2x2xf32>
    %459 = arith.addf %455, %458 : vector<2x2xf32>
    %460 = vector.broadcast %233 : vector<2x1xf32> to vector<2x2xf32>
    %461 = vector.broadcast %406 : vector<1x2xf32> to vector<2x2xf32>
    %462 = arith.mulf %460, %461 : vector<2x2xf32>
    %463 = arith.addf %459, %462 : vector<2x2xf32>
    %464 = vector.broadcast %240 : vector<2x1xf32> to vector<2x2xf32>
    %465 = vector.broadcast %411 : vector<1x2xf32> to vector<2x2xf32>
    %466 = arith.mulf %464, %465 : vector<2x2xf32>
    %467 = arith.addf %463, %466 : vector<2x2xf32>
    %468 = vector.broadcast %247 : vector<2x1xf32> to vector<2x2xf32>
    %469 = vector.broadcast %416 : vector<1x2xf32> to vector<2x2xf32>
    %470 = arith.mulf %468, %469 : vector<2x2xf32>
    %471 = arith.addf %467, %470 : vector<2x2xf32>
    %472 = vector.broadcast %254 : vector<2x1xf32> to vector<2x2xf32>
    %473 = vector.broadcast %421 : vector<1x2xf32> to vector<2x2xf32>
    %474 = arith.mulf %472, %473 : vector<2x2xf32>
    %475 = arith.addf %471, %474 : vector<2x2xf32>
    %476 = vector.broadcast %261 : vector<2x1xf32> to vector<2x2xf32>
    %477 = vector.broadcast %426 : vector<1x2xf32> to vector<2x2xf32>
    %478 = arith.mulf %476, %477 : vector<2x2xf32>
    %479 = arith.addf %475, %478 : vector<2x2xf32>
    %480 = vector.broadcast %268 : vector<2x1xf32> to vector<2x2xf32>
    %481 = vector.broadcast %431 : vector<1x2xf32> to vector<2x2xf32>
    %482 = arith.mulf %480, %481 : vector<2x2xf32>
    %483 = arith.addf %479, %482 : vector<2x2xf32>
    %c0_215 = arith.constant 0 : index
    %c0_216 = arith.constant 0 : index
    %484 = vector.load %arg6[%c0_215, %c0_216] : memref<2x1xf32, #tpu.memory_space<vmem>>, vector<2x1xf32>
    %485 = vector.shape_cast %484 : vector<2x1xf32> to vector<2x1xf32>
    %486 = vector.broadcast %485 : vector<2x1xf32> to vector<2x2xf32>
    %c0_217 = arith.constant 0 : index
    %c1_218 = arith.constant 1 : index
    %c0_219 = arith.constant 0 : index
    %c0_220 = arith.constant 0 : index
    %c0_221 = arith.constant 0 : index
    %487 = vector.load %arg5[%c0_217, %c1_218, %c0_219, %c0_220, %c0_221] : memref<1x3x2x2x1xf32, #tpu.memory_space<vmem>>, vector<1x1x1x2x1xf32>
    %488 = vector.shape_cast %487 : vector<1x1x1x2x1xf32> to vector<2x1xf32>
    %489 = vector.extract_strided_slice %218 {offsets = [0, 0], sizes = [1, 2], strides = [1, 1]} : vector<2x2xf32> to vector<1x2xf32>
    %490 = vector.broadcast %488 : vector<2x1xf32> to vector<2x2xf32>
    %491 = vector.broadcast %489 : vector<1x2xf32> to vector<2x2xf32>
    %492 = arith.mulf %490, %491 : vector<2x2xf32>
    %493 = arith.addf %486, %492 : vector<2x2xf32>
    %c0_222 = arith.constant 0 : index
    %c1_223 = arith.constant 1 : index
    %c1_224 = arith.constant 1 : index
    %c0_225 = arith.constant 0 : index
    %c0_226 = arith.constant 0 : index
    %494 = vector.load %arg5[%c0_222, %c1_223, %c1_224, %c0_225, %c0_226] : memref<1x3x2x2x1xf32, #tpu.memory_space<vmem>>, vector<1x1x1x2x1xf32>
    %495 = vector.shape_cast %494 : vector<1x1x1x2x1xf32> to vector<2x1xf32>
    %496 = vector.extract_strided_slice %218 {offsets = [1, 0], sizes = [1, 2], strides = [1, 1]} : vector<2x2xf32> to vector<1x2xf32>
    %497 = vector.broadcast %495 : vector<2x1xf32> to vector<2x2xf32>
    %498 = vector.broadcast %496 : vector<1x2xf32> to vector<2x2xf32>
    %499 = arith.mulf %497, %498 : vector<2x2xf32>
    %500 = arith.addf %493, %499 : vector<2x2xf32>
    %501 = vector.extract_strided_slice %228 {offsets = [0, 0], sizes = [1, 2], strides = [1, 1]} : vector<2x2xf32> to vector<1x2xf32>
    %502 = vector.broadcast %488 : vector<2x1xf32> to vector<2x2xf32>
    %503 = vector.broadcast %501 : vector<1x2xf32> to vector<2x2xf32>
    %504 = arith.mulf %502, %503 : vector<2x2xf32>
    %505 = arith.addf %486, %504 : vector<2x2xf32>
    %506 = vector.extract_strided_slice %228 {offsets = [1, 0], sizes = [1, 2], strides = [1, 1]} : vector<2x2xf32> to vector<1x2xf32>
    %507 = vector.broadcast %495 : vector<2x1xf32> to vector<2x2xf32>
    %508 = vector.broadcast %506 : vector<1x2xf32> to vector<2x2xf32>
    %509 = arith.mulf %507, %508 : vector<2x2xf32>
    %510 = arith.addf %505, %509 : vector<2x2xf32>
    %c0_227 = arith.constant 0 : index
    %c0_228 = arith.constant 0 : index
    %511 = vector.load %arg6[%c0_227, %c0_228] : memref<2x1xf32, #tpu.memory_space<vmem>>, vector<2x1xf32>
    %512 = vector.shape_cast %511 : vector<2x1xf32> to vector<2x1xf32>
    %513 = vector.broadcast %512 : vector<2x1xf32> to vector<2x2xf32>
    %c0_229 = arith.constant 0 : index
    %c1_230 = arith.constant 1 : index
    %c0_231 = arith.constant 0 : index
    %c0_232 = arith.constant 0 : index
    %c0_233 = arith.constant 0 : index
    %514 = vector.load %arg5[%c0_229, %c1_230, %c0_231, %c0_232, %c0_233] : memref<1x3x2x2x1xf32, #tpu.memory_space<vmem>>, vector<1x1x1x2x1xf32>
    %515 = vector.shape_cast %514 : vector<1x1x1x2x1xf32> to vector<2x1xf32>
    %516 = vector.extract_strided_slice %315 {offsets = [0, 0], sizes = [1, 2], strides = [1, 1]} : vector<2x2xf32> to vector<1x2xf32>
    %517 = vector.broadcast %515 : vector<2x1xf32> to vector<2x2xf32>
    %518 = vector.broadcast %516 : vector<1x2xf32> to vector<2x2xf32>
    %519 = arith.mulf %517, %518 : vector<2x2xf32>
    %520 = arith.addf %513, %519 : vector<2x2xf32>
    %c0_234 = arith.constant 0 : index
    %c1_235 = arith.constant 1 : index
    %c1_236 = arith.constant 1 : index
    %c0_237 = arith.constant 0 : index
    %c0_238 = arith.constant 0 : index
    %521 = vector.load %arg5[%c0_234, %c1_235, %c1_236, %c0_237, %c0_238] : memref<1x3x2x2x1xf32, #tpu.memory_space<vmem>>, vector<1x1x1x2x1xf32>
    %522 = vector.shape_cast %521 : vector<1x1x1x2x1xf32> to vector<2x1xf32>
    %523 = vector.extract_strided_slice %315 {offsets = [1, 0], sizes = [1, 2], strides = [1, 1]} : vector<2x2xf32> to vector<1x2xf32>
    %524 = vector.broadcast %522 : vector<2x1xf32> to vector<2x2xf32>
    %525 = vector.broadcast %523 : vector<1x2xf32> to vector<2x2xf32>
    %526 = arith.mulf %524, %525 : vector<2x2xf32>
    %527 = arith.addf %520, %526 : vector<2x2xf32>
    %c0_239 = arith.constant 0 : index
    %c2_240 = arith.constant 2 : index
    %c0_241 = arith.constant 0 : index
    %c0_242 = arith.constant 0 : index
    %c0_243 = arith.constant 0 : index
    %528 = vector.load %arg5[%c0_239, %c2_240, %c0_241, %c0_242, %c0_243] : memref<1x3x2x2x1xf32, #tpu.memory_space<vmem>>, vector<1x1x1x2x1xf32>
    %529 = vector.shape_cast %528 : vector<1x1x1x2x1xf32> to vector<2x1xf32>
    %530 = vector.extract_strided_slice %375 {offsets = [0, 0], sizes = [1, 2], strides = [1, 1]} : vector<2x2xf32> to vector<1x2xf32>
    %531 = vector.broadcast %529 : vector<2x1xf32> to vector<2x2xf32>
    %532 = vector.broadcast %530 : vector<1x2xf32> to vector<2x2xf32>
    %533 = arith.mulf %531, %532 : vector<2x2xf32>
    %534 = arith.addf %527, %533 : vector<2x2xf32>
    %c0_244 = arith.constant 0 : index
    %c2_245 = arith.constant 2 : index
    %c1_246 = arith.constant 1 : index
    %c0_247 = arith.constant 0 : index
    %c0_248 = arith.constant 0 : index
    %535 = vector.load %arg5[%c0_244, %c2_245, %c1_246, %c0_247, %c0_248] : memref<1x3x2x2x1xf32, #tpu.memory_space<vmem>>, vector<1x1x1x2x1xf32>
    %536 = vector.shape_cast %535 : vector<1x1x1x2x1xf32> to vector<2x1xf32>
    %537 = vector.extract_strided_slice %375 {offsets = [1, 0], sizes = [1, 2], strides = [1, 1]} : vector<2x2xf32> to vector<1x2xf32>
    %538 = vector.broadcast %536 : vector<2x1xf32> to vector<2x2xf32>
    %539 = vector.broadcast %537 : vector<1x2xf32> to vector<2x2xf32>
    %540 = arith.mulf %538, %539 : vector<2x2xf32>
    %541 = arith.addf %534, %540 : vector<2x2xf32>
    %c0_249 = arith.constant 0 : index
    %c0_250 = arith.constant 0 : index
    %c0_251 = arith.constant 0 : index
    %c0_252 = arith.constant 0 : index
    %c0_253 = arith.constant 0 : index
    %542 = vector.load %arg5[%c0_249, %c0_250, %c0_251, %c0_252, %c0_253] : memref<1x3x2x2x1xf32, #tpu.memory_space<vmem>>, vector<1x1x1x2x1xf32>
    %543 = vector.shape_cast %542 : vector<1x1x1x2x1xf32> to vector<2x1xf32>
    %544 = vector.broadcast %543 : vector<2x1xf32> to vector<2x2xf32>
    %545 = vector.broadcast %516 : vector<1x2xf32> to vector<2x2xf32>
    %546 = arith.mulf %544, %545 : vector<2x2xf32>
    %547 = arith.addf %513, %546 : vector<2x2xf32>
    %c0_254 = arith.constant 0 : index
    %c0_255 = arith.constant 0 : index
    %c1_256 = arith.constant 1 : index
    %c0_257 = arith.constant 0 : index
    %c0_258 = arith.constant 0 : index
    %548 = vector.load %arg5[%c0_254, %c0_255, %c1_256, %c0_257, %c0_258] : memref<1x3x2x2x1xf32, #tpu.memory_space<vmem>>, vector<1x1x1x2x1xf32>
    %549 = vector.shape_cast %548 : vector<1x1x1x2x1xf32> to vector<2x1xf32>
    %550 = vector.broadcast %549 : vector<2x1xf32> to vector<2x2xf32>
    %551 = vector.broadcast %523 : vector<1x2xf32> to vector<2x2xf32>
    %552 = arith.mulf %550, %551 : vector<2x2xf32>
    %553 = arith.addf %547, %552 : vector<2x2xf32>
    %554 = vector.broadcast %515 : vector<2x1xf32> to vector<2x2xf32>
    %555 = vector.broadcast %530 : vector<1x2xf32> to vector<2x2xf32>
    %556 = arith.mulf %554, %555 : vector<2x2xf32>
    %557 = arith.addf %553, %556 : vector<2x2xf32>
    %558 = vector.broadcast %522 : vector<2x1xf32> to vector<2x2xf32>
    %559 = vector.broadcast %537 : vector<1x2xf32> to vector<2x2xf32>
    %560 = arith.mulf %558, %559 : vector<2x2xf32>
    %561 = arith.addf %557, %560 : vector<2x2xf32>
    %562 = vector.extract_strided_slice %435 {offsets = [0, 0], sizes = [1, 2], strides = [1, 1]} : vector<2x2xf32> to vector<1x2xf32>
    %563 = vector.broadcast %515 : vector<2x1xf32> to vector<2x2xf32>
    %564 = vector.broadcast %562 : vector<1x2xf32> to vector<2x2xf32>
    %565 = arith.mulf %563, %564 : vector<2x2xf32>
    %566 = arith.addf %513, %565 : vector<2x2xf32>
    %567 = vector.extract_strided_slice %435 {offsets = [1, 0], sizes = [1, 2], strides = [1, 1]} : vector<2x2xf32> to vector<1x2xf32>
    %568 = vector.broadcast %522 : vector<2x1xf32> to vector<2x2xf32>
    %569 = vector.broadcast %567 : vector<1x2xf32> to vector<2x2xf32>
    %570 = arith.mulf %568, %569 : vector<2x2xf32>
    %571 = arith.addf %566, %570 : vector<2x2xf32>
    %572 = vector.extract_strided_slice %483 {offsets = [0, 0], sizes = [1, 2], strides = [1, 1]} : vector<2x2xf32> to vector<1x2xf32>
    %573 = vector.broadcast %529 : vector<2x1xf32> to vector<2x2xf32>
    %574 = vector.broadcast %572 : vector<1x2xf32> to vector<2x2xf32>
    %575 = arith.mulf %573, %574 : vector<2x2xf32>
    %576 = arith.addf %571, %575 : vector<2x2xf32>
    %577 = vector.extract_strided_slice %483 {offsets = [1, 0], sizes = [1, 2], strides = [1, 1]} : vector<2x2xf32> to vector<1x2xf32>
    %578 = vector.broadcast %536 : vector<2x1xf32> to vector<2x2xf32>
    %579 = vector.broadcast %577 : vector<1x2xf32> to vector<2x2xf32>
    %580 = arith.mulf %578, %579 : vector<2x2xf32>
    %581 = arith.addf %576, %580 : vector<2x2xf32>
    %582 = vector.broadcast %543 : vector<2x1xf32> to vector<2x2xf32>
    %583 = vector.broadcast %562 : vector<1x2xf32> to vector<2x2xf32>
    %584 = arith.mulf %582, %583 : vector<2x2xf32>
    %585 = arith.addf %513, %584 : vector<2x2xf32>
    %586 = vector.broadcast %549 : vector<2x1xf32> to vector<2x2xf32>
    %587 = vector.broadcast %567 : vector<1x2xf32> to vector<2x2xf32>
    %588 = arith.mulf %586, %587 : vector<2x2xf32>
    %589 = arith.addf %585, %588 : vector<2x2xf32>
    %590 = vector.broadcast %515 : vector<2x1xf32> to vector<2x2xf32>
    %591 = vector.broadcast %572 : vector<1x2xf32> to vector<2x2xf32>
    %592 = arith.mulf %590, %591 : vector<2x2xf32>
    %593 = arith.addf %589, %592 : vector<2x2xf32>
    %594 = vector.broadcast %522 : vector<2x1xf32> to vector<2x2xf32>
    %595 = vector.broadcast %577 : vector<1x2xf32> to vector<2x2xf32>
    %596 = arith.mulf %594, %595 : vector<2x2xf32>
    %597 = arith.addf %593, %596 : vector<2x2xf32>
    %598 = tpu.concatenate %541, %561, %581, %597 in 0 : vector<2x2xf32>, vector<2x2xf32>, vector<2x2xf32>, vector<2x2xf32> -> vector<8x2xf32>
    %599 = tpu.concatenate %500, %500, %510, %510 in 0 : vector<2x2xf32>, vector<2x2xf32>, vector<2x2xf32>, vector<2x2xf32> -> vector<8x2xf32>
    %cst = arith.constant 4.471500e-02 : f32
    %600 = vector.broadcast %cst : f32 to vector<8x2xf32>
    %601 = arith.mulf %599, %600 : vector<8x2xf32>
    %602 = arith.addf %598, %601 : vector<8x2xf32>
    %cst_259 = arith.constant 0.797884583 : f32
    %603 = vector.broadcast %cst_259 : f32 to vector<8x2xf32>
    %604 = arith.mulf %602, %603 : vector<8x2xf32>
    %605 = math.tanh %604 : vector<8x2xf32>
    %cst_260 = arith.constant 1.000000e+00 : f32
    %606 = vector.broadcast %cst_260 : f32 to vector<8x2xf32>
    %607 = arith.addf %605, %606 : vector<8x2xf32>
    %cst_261 = arith.constant 5.000000e-01 : f32
    %608 = vector.broadcast %cst_261 : f32 to vector<8x2xf32>
    %609 = arith.mulf %607, %608 : vector<8x2xf32>
    %610 = arith.mulf %607, %607 : vector<8x2xf32>
    %611 = arith.mulf %610, %607 : vector<8x2xf32>
    %cst_262 = arith.constant 4.471500e-02 : f32
    %612 = vector.broadcast %cst_262 : f32 to vector<8x2xf32>
    %613 = arith.mulf %611, %612 : vector<8x2xf32>
    %614 = arith.addf %610, %613 : vector<8x2xf32>
    %cst_263 = arith.constant 0.797884583 : f32
    %615 = vector.broadcast %cst_263 : f32 to vector<8x2xf32>
    %616 = arith.mulf %614, %615 : vector<8x2xf32>
    %617 = math.tanh %616 : vector<8x2xf32>
    %cst_264 = arith.constant 1.000000e+00 : f32
    %618 = vector.broadcast %cst_264 : f32 to vector<8x2xf32>
    %619 = arith.addf %617, %618 : vector<8x2xf32>
    %620 = arith.mulf %609, %619 : vector<8x2xf32>
    %621 = arith.mulf %611, %619 : vector<8x2xf32>
    %cst_265 = arith.constant 4.471500e-02 : f32
    %622 = vector.broadcast %cst_265 : f32 to vector<8x2xf32>
    %623 = arith.mulf %621, %622 : vector<8x2xf32>
    %624 = arith.addf %620, %623 : vector<8x2xf32>
    %625 = tpu.concatenate %624, %620, %624 in 0 : vector<8x2xf32>, vector<8x2xf32>, vector<8x2xf32> -> vector<24x2xf32>
    %c0_266 = arith.constant 0 : index
    %c0_267 = arith.constant 0 : index
    %626 = vector.load %arg9[%c0_266, %c0_267] : memref<24x2xf32, #tpu.memory_space<vmem>>, vector<24x2xf32>
    tpu.vector_store %arg9[%c0_266, %c0_267], %625 {strides = array<i32>} : memref<24x2xf32, #tpu.memory_space<vmem>>, vector<24x2xf32>,
    return
  }
}

</mosaic_0001>

<llo_original>
// kernel: model_forward.1
$region0: #{model_forward.1}
  #allocation0 [shape = 'u32[]', space=smem, size = 0x4, offset = 0x4, fixed_abs, tag = 'smem constant byte address 0x4 - core index']
  #allocation1 [shape = 'u32[144,128]{1,0:T(1,128)}', space=vmem, size = 0x12000, scoped, tag = 'internal scratch']
  %s0 = inlined_call_operand.vmem [shape: f32[16,1,4,2], index: 0, kind: input, shape index: {}]
  %s1 = inlined_call_operand.vmem [shape: f32[1,3,4,2,1], index: 1, kind: input, shape index: {}]
  %s2 = inlined_call_operand.vmem [shape: f32[2,1], index: 2, kind: input, shape index: {}]
  %s3 = inlined_call_operand.vmem [shape: f32[2,2,4,6,1], index: 3, kind: input, shape index: {}]
  %s4 = inlined_call_operand.vmem [shape: f32[6,1], index: 4, kind: input, shape index: {}]
  %s5 = inlined_call_operand.vmem [shape: f32[1,3,2,2,1], index: 5, kind: input, shape index: {}]
  %s6 = inlined_call_operand.vmem [shape: f32[2,1], index: 6, kind: input, shape index: {}]
  %s7 = inlined_call_operand.vmem [shape: f32[1,3,6,2,1], index: 7, kind: input, shape index: {}]
  %s8 = inlined_call_operand.vmem [shape: f32[2,1], index: 8, kind: input, shape index: {}]
  %s9 = inlined_call_operand.vmem [shape: f32[24,2], index: 9, kind: output, shape index: {}]
  %s10 = sld [smem:[#allocation0]]
  $region46: #{model_forward.1} parent=0
    _
  %s12 = ssub.s32 1, %s10
  %s13 = scalar_select 0, %s12, %s10
  // Predicated region
  $region2: #{model_forward.1} parent=0 // pred_check
    _
  $region3: #{model_forward.1} parent=0 // pred_check_branch
    %15 = sbr.rel (0) target = $region5
  $region4: #{model_forward.1} parent=0 // pred_region
    _
  $region5: #{model_forward.1} parent=0 // pred_fallthru
    _
  // Predicated region
  $region6: #{model_forward.1} parent=0 // pred_check
    _
  $region7: #{model_forward.1} parent=0 // pred_check_branch
    %17 = sbr.rel (0) target = $region9
  $region8: #{model_forward.1} parent=0 // pred_region
    _
  $region9: #{model_forward.1} parent=0 // pred_fallthru
    _
  // Predicated region
  $region10: #{model_forward.1} parent=0 // pred_check
    _
  $region11: #{model_forward.1} parent=0 // pred_check_branch
    %19 = sbr.rel (0) target = $region13
  $region12: #{model_forward.1} parent=0 // pred_region
    _
  $region13: #{model_forward.1} parent=0 // pred_fallthru
    _
  // Predicated region
  $region14: #{model_forward.1} parent=0 // pred_check
    _
  $region15: #{model_forward.1} parent=0 // pred_check_branch
    %21 = sbr.rel (0) target = $region17
  $region16: #{model_forward.1} parent=0 // pred_region
    _
  $region17: #{model_forward.1} parent=0 // pred_fallthru
    _
  // Predicated region
  $region18: #{model_forward.1} parent=0 // pred_check
    _
  $region19: #{model_forward.1} parent=0 // pred_check_branch
    %23 = sbr.rel (0) target = $region21
  $region20: #{model_forward.1} parent=0 // pred_region
    _
  $region21: #{model_forward.1} parent=0 // pred_fallthru
    _
  // Predicated region
  $region22: #{model_forward.1} parent=0 // pred_check
    _
  $region23: #{model_forward.1} parent=0 // pred_check_branch
    %25 = sbr.rel (0) target = $region25
  $region24: #{model_forward.1} parent=0 // pred_region
    _
  $region25: #{model_forward.1} parent=0 // pred_fallthru
    _
  // Predicated region
  $region26: #{model_forward.1} parent=0 // pred_check
    _
  $region27: #{model_forward.1} parent=0 // pred_check_branch
    %27 = sbr.rel (0) target = $region29
  $region28: #{model_forward.1} parent=0 // pred_region
    _
  $region29: #{model_forward.1} parent=0 // pred_fallthru
    _
  // Predicated region
  $region30: #{model_forward.1} parent=0 // pred_check
    _
  $region31: #{model_forward.1} parent=0 // pred_check_branch
    %29 = sbr.rel (0) target = $region33
  $region32: #{model_forward.1} parent=0 // pred_region
    _
  $region33: #{model_forward.1} parent=0 // pred_fallthru
    _
  // Predicated region
  $region34: #{model_forward.1} parent=0 // pred_check
    _
  $region35: #{model_forward.1} parent=0 // pred_check_branch
    %31 = sbr.rel (0) target = $region37
  $region36: #{model_forward.1} parent=0 // pred_region
    _
  $region37: #{model_forward.1} parent=0 // pred_fallthru
    _
  %v32 = vld [vmem:[%s0] sm:$0xf]
  %s33 = scalar_lea.vmem %s0, 32
  %v34 = vld [vmem:[%s33] sm:$0xf]
  %s35 = scalar_lea.vmem %s0, 44
  %v36 = vld [vmem:[%s35] sm:$0xf]
  %s37 = scalar_lea.vmem %s0, 48
  %v38 = vld [vmem:[%s37] sm:$0xf]
  %v39 = vld [vmem:[%s2] sm:$0x3]
  %41 = vset.pattern.permute.xlu0 0
  %42 = vperm.xlu0 %41, %v39
  %v43 = vpop.permute.xlu0 %42
  %s45 = scalar_lea.vmem %s1, 8
  %v46 = vld [vmem:[%s45] sm:$0x3]
  %48 = vset.pattern.permute.xlu0 0
  %49 = vperm.xlu0 %48, %v46
  %v50 = vpop.permute.xlu0 %49
  %v52 = vlaneseq
  %v53 = vshrl.u32 %v52, 7
  %v54 = vsub.s32 0, %v53
  %v55 = vrot.slane %v32, %v54
  %v56 = vmul.f32 %v50, %v55
  %v57 = vadd.f32 %v43, %v56
  %s58 = scalar_lea.vmem %s1, 10
  %v59 = vld [vmem:[%s58] sm:$0x3]
  %61 = vset.pattern.permute.xlu0 0
  %62 = vperm.xlu0 %61, %v59
  %v63 = vpop.permute.xlu0 %62
  %v65 = vlaneseq
  %v66 = vshrl.u32 %v65, 7
  %v67 = vsub.s32 1, %v66
  %v68 = vrot.slane %v32, %v67
  %v69 = vmul.f32 %v63, %v68
  %v70 = vadd.f32 %v57, %v69
  %s71 = scalar_lea.vmem %s1, 12
  %v72 = vld [vmem:[%s71] sm:$0x3]
  %74 = vset.pattern.permute.xlu0 0
  %75 = vperm.xlu0 %74, %v72
  %v76 = vpop.permute.xlu0 %75
  %v78 = vlaneseq
  %v79 = vshrl.u32 %v78, 7
  %v80 = vsub.s32 2, %v79
  %v81 = vrot.slane %v32, %v80
  %v82 = vmul.f32 %v76, %v81
  %v83 = vadd.f32 %v70, %v82
  %s84 = scalar_lea.vmem %s1, 14
  %v85 = vld [vmem:[%s84] sm:$0x3]
  %87 = vset.pattern.permute.xlu0 0
  %88 = vperm.xlu0 %87, %v85
  %v89 = vpop.permute.xlu0 %88
  %v91 = vlaneseq
  %v92 = vshrl.u32 %v91, 7
  %v93 = vsub.s32 3, %v92
  %v94 = vrot.slane %v32, %v93
  %v95 = vmul.f32 %v89, %v94
  %v96 = vadd.f32 %v83, %v95
  %v97 = vlaneseq
  %v98 = vshrl.u32 %v97, 7
  %v99 = vsub.s32 0, %v98
  %v100 = vrot.slane %v34, %v99
  %v101 = vmul.f32 %v50, %v100
  %v102 = vadd.f32 %v43, %v101
  %v103 = vlaneseq
  %v104 = vshrl.u32 %v103, 7
  %v105 = vsub.s32 1, %v104
  %v106 = vrot.slane %v34, %v105
  %v107 = vmul.f32 %v63, %v106
  %v108 = vadd.f32 %v102, %v107
  %v109 = vlaneseq
  %v110 = vshrl.u32 %v109, 7
  %v111 = vsub.s32 2, %v110
  %v112 = vrot.slane %v34, %v111
  %v113 = vmul.f32 %v76, %v112
  %v114 = vadd.f32 %v108, %v113
  %v115 = vlaneseq
  %v116 = vshrl.u32 %v115, 7
  %v117 = vsub.s32 3, %v116
  %v118 = vrot.slane %v34, %v117
  %v119 = vmul.f32 %v89, %v118
  %v120 = vadd.f32 %v114, %v119
  %v121 = vld [vmem:[%s4] sm:$0x3f]
  %123 = vset.pattern.permute.xlu0 0
  %124 = vperm.xlu0 %123, %v121
  %v125 = vpop.permute.xlu0 %124
  %s127 = scalar_lea.vmem %s3, 96
  %v128 = vld [vmem:[%s127] sm:$0x3f]
  %130 = vset.pattern.permute.xlu0 0
  %131 = vperm.xlu0 %130, %v128
  %v132 = vpop.permute.xlu0 %131
  %v134 = vmul.f32 %v132, %v55
  %v135 = vadd.f32 %v125, %v134
  %s136 = scalar_lea.vmem %s3, 104
  %v137 = vld [vmem:[%s136] sm:$0x3f]
  %139 = vset.pattern.permute.xlu0 0
  %140 = vperm.xlu0 %139, %v137
  %v141 = vpop.permute.xlu0 %140
  %v143 = vmul.f32 %v141, %v68
  %v144 = vadd.f32 %v135, %v143
  %s145 = scalar_lea.vmem %s3, 112
  %v146 = vld [vmem:[%s145] sm:$0x3f]
  %148 = vset.pattern.permute.xlu0 0
  %149 = vperm.xlu0 %148, %v146
  %v150 = vpop.permute.xlu0 %149
  %v152 = vmul.f32 %v150, %v81
  %v153 = vadd.f32 %v144, %v152
  %s154 = scalar_lea.vmem %s3, 120
  %v155 = vld [vmem:[%s154] sm:$0x3f]
  %157 = vset.pattern.permute.xlu0 0
  %158 = vperm.xlu0 %157, %v155
  %v159 = vpop.permute.xlu0 %158
  %v161 = vmul.f32 %v159, %v94
  %v162 = vadd.f32 %v153, %v161
  %s163 = scalar_lea.vmem %s3, 64
  %v164 = vld [vmem:[%s163] sm:$0x3f]
  %166 = vset.pattern.permute.xlu0 0
  %167 = vperm.xlu0 %166, %v164
  %v168 = vpop.permute.xlu0 %167
  %v170 = vmul.f32 %v168, %v55
  %v171 = vadd.f32 %v125, %v170
  %s172 = scalar_lea.vmem %s3, 72
  %v173 = vld [vmem:[%s172] sm:$0x3f]
  %175 = vset.pattern.permute.xlu0 0
  %176 = vperm.xlu0 %175, %v173
  %v177 = vpop.permute.xlu0 %176
  %v179 = vmul.f32 %v177, %v68
  %v180 = vadd.f32 %v171, %v179
  %s181 = scalar_lea.vmem %s3, 80
  %v182 = vld [vmem:[%s181] sm:$0x3f]
  %184 = vset.pattern.permute.xlu0 0
  %185 = vperm.xlu0 %184, %v182
  %v186 = vpop.permute.xlu0 %185
  %v188 = vmul.f32 %v186, %v81
  %v189 = vadd.f32 %v180, %v188
  %s190 = scalar_lea.vmem %s3, 88
  %v191 = vld [vmem:[%s190] sm:$0x3f]
  %193 = vset.pattern.permute.xlu0 0
  %194 = vperm.xlu0 %193, %v191
  %v195 = vpop.permute.xlu0 %194
  %v197 = vmul.f32 %v195, %v94
  %v198 = vadd.f32 %v189, %v197
  %s199 = scalar_lea.vmem %s3, 32
  %v200 = vld [vmem:[%s199] sm:$0x3f]
  %s201 = scalar_lea.vmem %s3, 40
  %v202 = vld [vmem:[%s201] sm:$0x3f]
  %s203 = scalar_lea.vmem %s3, 48
  %v204 = vld [vmem:[%s203] sm:$0x3f]
  %s205 = scalar_lea.vmem %s3, 56
  %v206 = vld [vmem:[%s205] sm:$0x3f]
  %v207 = vld [vmem:[%s3] sm:$0x3f]
  %s208 = scalar_lea.vmem %s3, 8
  %v209 = vld [vmem:[%s208] sm:$0x3f]
  %s210 = scalar_lea.vmem %s3, 16
  %v211 = vld [vmem:[%s210] sm:$0x3f]
  %s212 = scalar_lea.vmem %s3, 24
  %v213 = vld [vmem:[%s212] sm:$0x3f]
  %215 = vset.pattern.permute.xlu0 0
  %216 = vperm.xlu0 %215, %v200
  %v217 = vpop.permute.xlu0 %216
  %v219 = vlaneseq
  %v220 = vshrl.u32 %v219, 7
  %v221 = vsub.s32 0, %v220
  %v222 = vrot.slane %v36, %v221
  %v223 = vmul.f32 %v217, %v222
  %v224 = vadd.f32 %v125, %v223
  %226 = vset.pattern.permute.xlu0 0
  %227 = vperm.xlu0 %226, %v202
  %v228 = vpop.permute.xlu0 %227
  %v230 = vlaneseq
  %v231 = vshrl.u32 %v230, 7
  %v232 = vsub.s32 1, %v231
  %v233 = vrot.slane %v36, %v232
  %v234 = vmul.f32 %v228, %v233
  %v235 = vadd.f32 %v224, %v234
  %237 = vset.pattern.permute.xlu0 0
  %238 = vperm.xlu0 %237, %v204
  %v239 = vpop.permute.xlu0 %238
  %v241 = vlaneseq
  %v242 = vshrl.u32 %v241, 7
  %v243 = vsub.s32 2, %v242
  %v244 = vrot.slane %v36, %v243
  %v245 = vmul.f32 %v239, %v244
  %v246 = vadd.f32 %v235, %v245
  %248 = vset.pattern.permute.xlu0 0
  %249 = vperm.xlu0 %248, %v206
  %v250 = vpop.permute.xlu0 %249
  %v252 = vlaneseq
  %v253 = vshrl.u32 %v252, 7
  %v254 = vsub.s32 3, %v253
  %v255 = vrot.slane %v36, %v254
  %v256 = vmul.f32 %v250, %v255
  %v257 = vadd.f32 %v246, %v256
  %v258 = vlaneseq
  %v259 = vshrl.u32 %v258, 7
  %v260 = vsub.s32 0, %v259
  %v261 = vrot.slane %v38, %v260
  %v262 = vmul.f32 %v132, %v261
  %v263 = vadd.f32 %v257, %v262
  %v264 = vlaneseq
  %v265 = vshrl.u32 %v264, 7
  %v266 = vsub.s32 1, %v265
  %v267 = vrot.slane %v38, %v266
  %v268 = vmul.f32 %v141, %v267
  %v269 = vadd.f32 %v263, %v268
  %v270 = vlaneseq
  %v271 = vshrl.u32 %v270, 7
  %v272 = vsub.s32 2, %v271
  %v273 = vrot.slane %v38, %v272
  %v274 = vmul.f32 %v150, %v273
  %v275 = vadd.f32 %v269, %v274
  %v276 = vlaneseq
  %v277 = vshrl.u32 %v276, 7
  %v278 = vsub.s32 3, %v277
  %v279 = vrot.slane %v38, %v278
  %v280 = vmul.f32 %v159, %v279
  %v281 = vadd.f32 %v275, %v280
  %283 = vset.pattern.permute.xlu0 0
  %284 = vperm.xlu0 %283, %v207
  %v285 = vpop.permute.xlu0 %284
  %v287 = vmul.f32 %v285, %v222
  %v288 = vadd.f32 %v125, %v287
  %290 = vset.pattern.permute.xlu0 0
  %291 = vperm.xlu0 %290, %v209
  %v292 = vpop.permute.xlu0 %291
  %v294 = vmul.f32 %v292, %v233
  %v295 = vadd.f32 %v288, %v294
  %297 = vset.pattern.permute.xlu0 0
  %298 = vperm.xlu0 %297, %v211
  %v299 = vpop.permute.xlu0 %298
  %v301 = vmul.f32 %v299, %v244
  %v302 = vadd.f32 %v295, %v301
  %304 = vset.pattern.permute.xlu0 0
  %305 = vperm.xlu0 %304, %v213
  %v306 = vpop.permute.xlu0 %305
  %v308 = vmul.f32 %v306, %v255
  %v309 = vadd.f32 %v302, %v308
  %v310 = vmul.f32 %v168, %v261
  %v311 = vadd.f32 %v309, %v310
  %v312 = vmul.f32 %v177, %v267
  %v313 = vadd.f32 %v311, %v312
  %v314 = vmul.f32 %v186, %v273
  %v315 = vadd.f32 %v313, %v314
  %v316 = vmul.f32 %v195, %v279
  %v317 = vadd.f32 %v315, %v316
  %v318 = vld [vmem:[%s6] sm:$0x3]
  %320 = vset.pattern.permute.xlu0 0
  %321 = vperm.xlu0 %320, %v318
  %v322 = vpop.permute.xlu0 %321
  %s324 = scalar_lea.vmem %s5, 4
  %v325 = vld [vmem:[%s324] sm:$0x3]
  %327 = vset.pattern.permute.xlu0 0
  %328 = vperm.xlu0 %327, %v325
  %v329 = vpop.permute.xlu0 %328
  %v331 = vlaneseq
  %v332 = vshrl.u32 %v331, 7
  %v333 = vsub.s32 0, %v332
  %v334 = vrot.slane %v96, %v333
  %v335 = vmul.f32 %v329, %v334
  %v336 = vadd.f32 %v322, %v335
  %s337 = scalar_lea.vmem %s5, 6
  %v338 = vld [vmem:[%s337] sm:$0x3]
  %340 = vset.pattern.permute.xlu0 0
  %341 = vperm.xlu0 %340, %v338
  %v342 = vpop.permute.xlu0 %341
  %v344 = vlaneseq
  %v345 = vshrl.u32 %v344, 7
  %v346 = vsub.s32 1, %v345
  %v347 = vrot.slane %v96, %v346
  %v348 = vmul.f32 %v342, %v347
  %v349 = vadd.f32 %v336, %v348
  %v350 = vlaneseq
  %v351 = vshrl.u32 %v350, 7
  %v352 = vsub.s32 0, %v351
  %v353 = vrot.slane %v120, %v352
  %v354 = vmul.f32 %v329, %v353
  %v355 = vadd.f32 %v322, %v354
  %v356 = vlaneseq
  %v357 = vshrl.u32 %v356, 7
  %v358 = vsub.s32 1, %v357
  %v359 = vrot.slane %v120, %v358
  %v360 = vmul.f32 %v342, %v359
  %v361 = vadd.f32 %v355, %v360
  %v362 = vld [vmem:[%s8] sm:$0x3]
  %364 = vset.pattern.permute.xlu0 0
  %365 = vperm.xlu0 %364, %v362
  %v366 = vpop.permute.xlu0 %365
  %s368 = scalar_lea.vmem %s7, 12
  %v369 = vld [vmem:[%s368] sm:$0x3]
  %371 = vset.pattern.permute.xlu0 0
  %372 = vperm.xlu0 %371, %v369
  %v373 = vpop.permute.xlu0 %372
  %v375 = vlaneseq
  %v376 = vshrl.u32 %v375, 7
  %v377 = vsub.s32 0, %v376
  %v378 = vrot.slane %v162, %v377
  %v379 = vmul.f32 %v373, %v378
  %v380 = vadd.f32 %v366, %v379
  %s381 = scalar_lea.vmem %s7, 14
  %v382 = vld [vmem:[%s381] sm:$0x3]
  %384 = vset.pattern.permute.xlu0 0
  %385 = vperm.xlu0 %384, %v382
  %v386 = vpop.permute.xlu0 %385
  %v388 = vlaneseq
  %v389 = vshrl.u32 %v388, 7
  %v390 = vsub.s32 1, %v389
  %v391 = vrot.slane %v162, %v390
  %v392 = vmul.f32 %v386, %v391
  %v393 = vadd.f32 %v380, %v392
  %s394 = scalar_lea.vmem %s7, 16
  %v395 = vld [vmem:[%s394] sm:$0x3]
  %397 = vset.pattern.permute.xlu0 0
  %398 = vperm.xlu0 %397, %v395
  %v399 = vpop.permute.xlu0 %398
  %v401 = vlaneseq
  %v402 = vshrl.u32 %v401, 7
  %v403 = vsub.s32 2, %v402
  %v404 = vrot.slane %v162, %v403
  %v405 = vmul.f32 %v399, %v404
  %v406 = vadd.f32 %v393, %v405
  %s407 = scalar_lea.vmem %s7, 18
  %v408 = vld [vmem:[%s407] sm:$0x3]
  %410 = vset.pattern.permute.xlu0 0
  %411 = vperm.xlu0 %410, %v408
  %v412 = vpop.permute.xlu0 %411
  %v414 = vlaneseq
  %v415 = vshrl.u32 %v414, 7
  %v416 = vsub.s32 3, %v415
  %v417 = vrot.slane %v162, %v416
  %v418 = vmul.f32 %v412, %v417
  %v419 = vadd.f32 %v406, %v418
  %s420 = scalar_lea.vmem %s7, 20
  %v421 = vld [vmem:[%s420] sm:$0x3]
  %423 = vset.pattern.permute.xlu0 0
  %424 = vperm.xlu0 %423, %v421
  %v425 = vpop.permute.xlu0 %424
  %v427 = vlaneseq
  %v428 = vshrl.u32 %v427, 7
  %v429 = vsub.s32 4, %v428
  %v430 = vrot.slane %v162, %v429
  %v431 = vmul.f32 %v425, %v430
  %v432 = vadd.f32 %v419, %v431
  %s433 = scalar_lea.vmem %s7, 22
  %v434 = vld [vmem:[%s433] sm:$0x3]
  %436 = vset.pattern.permute.xlu0 0
  %437 = vperm.xlu0 %436, %v434
  %v438 = vpop.permute.xlu0 %437
  %v440 = vlaneseq
  %v441 = vshrl.u32 %v440, 7
  %v442 = vsub.s32 5, %v441
  %v443 = vrot.slane %v162, %v442
  %v444 = vmul.f32 %v438, %v443
  %v445 = vadd.f32 %v432, %v444
  %s446 = scalar_lea.vmem %s7, 24
  %v447 = vld [vmem:[%s446] sm:$0x3]
  %449 = vset.pattern.permute.xlu0 0
  %450 = vperm.xlu0 %449, %v447
  %v451 = vpop.permute.xlu0 %450
  %v453 = vlaneseq
  %v454 = vshrl.u32 %v453, 7
  %v455 = vsub.s32 0, %v454
  %v456 = vrot.slane %v198, %v455
  %v457 = vmul.f32 %v451, %v456
  %v458 = vadd.f32 %v445, %v457
  %s459 = scalar_lea.vmem %s7, 26
  %v460 = vld [vmem:[%s459] sm:$0x3]
  %462 = vset.pattern.permute.xlu0 0
  %463 = vperm.xlu0 %462, %v460
  %v464 = vpop.permute.xlu0 %463
  %v466 = vlaneseq
  %v467 = vshrl.u32 %v466, 7
  %v468 = vsub.s32 1, %v467
  %v469 = vrot.slane %v198, %v468
  %v470 = vmul.f32 %v464, %v469
  %v471 = vadd.f32 %v458, %v470
  %s472 = scalar_lea.vmem %s7, 28
  %v473 = vld [vmem:[%s472] sm:$0x3]
  %475 = vset.pattern.permute.xlu0 0
  %476 = vperm.xlu0 %475, %v473
  %v477 = vpop.permute.xlu0 %476
  %v479 = vlaneseq
  %v480 = vshrl.u32 %v479, 7
  %v481 = vsub.s32 2, %v480
  %v482 = vrot.slane %v198, %v481
  %v483 = vmul.f32 %v477, %v482
  %v484 = vadd.f32 %v471, %v483
  %s485 = scalar_lea.vmem %s7, 30
  %v486 = vld [vmem:[%s485] sm:$0x3]
  %488 = vset.pattern.permute.xlu0 0
  %489 = vperm.xlu0 %488, %v486
  %v490 = vpop.permute.xlu0 %489
  %v492 = vlaneseq
  %v493 = vshrl.u32 %v492, 7
  %v494 = vsub.s32 3, %v493
  %v495 = vrot.slane %v198, %v494
  %v496 = vmul.f32 %v490, %v495
  %v497 = vadd.f32 %v484, %v496
  %s498 = scalar_lea.vmem %s7, 32
  %v499 = vld [vmem:[%s498] sm:$0x3]
  %501 = vset.pattern.permute.xlu0 0
  %502 = vperm.xlu0 %501, %v499
  %v503 = vpop.permute.xlu0 %502
  %v505 = vlaneseq
  %v506 = vshrl.u32 %v505, 7
  %v507 = vsub.s32 4, %v506
  %v508 = vrot.slane %v198, %v507
  %v509 = vmul.f32 %v503, %v508
  %v510 = vadd.f32 %v497, %v509
  %s511 = scalar_lea.vmem %s7, 34
  %v512 = vld [vmem:[%s511] sm:$0x3]
  %514 = vset.pattern.permute.xlu0 0
  %515 = vperm.xlu0 %514, %v512
  %v516 = vpop.permute.xlu0 %515
  %v518 = vlaneseq
  %v519 = vshrl.u32 %v518, 7
  %v520 = vsub.s32 5, %v519
  %v521 = vrot.slane %v198, %v520
  %v522 = vmul.f32 %v516, %v521
  %v523 = vadd.f32 %v510, %v522
  %v524 = vld [vmem:[%s7] sm:$0x3]
  %526 = vset.pattern.permute.xlu0 0
  %527 = vperm.xlu0 %526, %v524
  %v528 = vpop.permute.xlu0 %527
  %v530 = vmul.f32 %v528, %v378
  %v531 = vadd.f32 %v366, %v530
  %s532 = scalar_lea.vmem %s7, 2
  %v533 = vld [vmem:[%s532] sm:$0x3]
  %535 = vset.pattern.permute.xlu0 0
  %536 = vperm.xlu0 %535, %v533
  %v537 = vpop.permute.xlu0 %536
  %v539 = vmul.f32 %v537, %v391
  %v540 = vadd.f32 %v531, %v539
  %s541 = scalar_lea.vmem %s7, 4
  %v542 = vld [vmem:[%s541] sm:$0x3]
  %544 = vset.pattern.permute.xlu0 0
  %545 = vperm.xlu0 %544, %v542
  %v546 = vpop.permute.xlu0 %545
  %v548 = vmul.f32 %v546, %v404
  %v549 = vadd.f32 %v540, %v548
  %s550 = scalar_lea.vmem %s7, 6
  %v551 = vld [vmem:[%s550] sm:$0x3]
  %553 = vset.pattern.permute.xlu0 0
  %554 = vperm.xlu0 %553, %v551
  %v555 = vpop.permute.xlu0 %554
  %v557 = vmul.f32 %v555, %v417
  %v558 = vadd.f32 %v549, %v557
  %s559 = scalar_lea.vmem %s7, 8
  %v560 = vld [vmem:[%s559] sm:$0x3]
  %562 = vset.pattern.permute.xlu0 0
  %563 = vperm.xlu0 %562, %v560
  %v564 = vpop.permute.xlu0 %563
  %v566 = vmul.f32 %v564, %v430
  %v567 = vadd.f32 %v558, %v566
  %s568 = scalar_lea.vmem %s7, 10
  %v569 = vld [vmem:[%s568] sm:$0x3]
  %571 = vset.pattern.permute.xlu0 0
  %572 = vperm.xlu0 %571, %v569
  %v573 = vpop.permute.xlu0 %572
  %v575 = vmul.f32 %v573, %v443
  %v576 = vadd.f32 %v567, %v575
  %v577 = vmul.f32 %v373, %v456
  %v578 = vadd.f32 %v576, %v577
  %v579 = vmul.f32 %v386, %v469
  %v580 = vadd.f32 %v578, %v579
  %v581 = vmul.f32 %v399, %v482
  %v582 = vadd.f32 %v580, %v581
  %v583 = vmul.f32 %v412, %v495
  %v584 = vadd.f32 %v582, %v583
  %v585 = vmul.f32 %v425, %v508
  %v586 = vadd.f32 %v584, %v585
  %v587 = vmul.f32 %v438, %v521
  %v588 = vadd.f32 %v586, %v587
  %v589 = vlaneseq
  %v590 = vshrl.u32 %v589, 7
  %v591 = vsub.s32 0, %v590
  %v592 = vrot.slane %v281, %v591
  %v593 = vmul.f32 %v373, %v592
  %v594 = vadd.f32 %v366, %v593
  %v595 = vlaneseq
  %v596 = vshrl.u32 %v595, 7
  %v597 = vsub.s32 1, %v596
  %v598 = vrot.slane %v281, %v597
  %v599 = vmul.f32 %v386, %v598
  %v600 = vadd.f32 %v594, %v599
  %v601 = vlaneseq
  %v602 = vshrl.u32 %v601, 7
  %v603 = vsub.s32 2, %v602
  %v604 = vrot.slane %v281, %v603
  %v605 = vmul.f32 %v399, %v604
  %v606 = vadd.f32 %v600, %v605
  %v607 = vlaneseq
  %v608 = vshrl.u32 %v607, 7
  %v609 = vsub.s32 3, %v608
  %v610 = vrot.slane %v281, %v609
  %v611 = vmul.f32 %v412, %v610
  %v612 = vadd.f32 %v606, %v611
  %v613 = vlaneseq
  %v614 = vshrl.u32 %v613, 7
  %v615 = vsub.s32 4, %v614
  %v616 = vrot.slane %v281, %v615
  %v617 = vmul.f32 %v425, %v616
  %v618 = vadd.f32 %v612, %v617
  %v619 = vlaneseq
  %v620 = vshrl.u32 %v619, 7
  %v621 = vsub.s32 5, %v620
  %v622 = vrot.slane %v281, %v621
  %v623 = vmul.f32 %v438, %v622
  %v624 = vadd.f32 %v618, %v623
  %v625 = vlaneseq
  %v626 = vshrl.u32 %v625, 7
  %v627 = vsub.s32 0, %v626
  %v628 = vrot.slane %v317, %v627
  %v629 = vmul.f32 %v451, %v628
  %v630 = vadd.f32 %v624, %v629
  %v631 = vlaneseq
  %v632 = vshrl.u32 %v631, 7
  %v633 = vsub.s32 1, %v632
  %v634 = vrot.slane %v317, %v633
  %v635 = vmul.f32 %v464, %v634
  %v636 = vadd.f32 %v630, %v635
  %v637 = vlaneseq
  %v638 = vshrl.u32 %v637, 7
  %v639 = vsub.s32 2, %v638
  %v640 = vrot.slane %v317, %v639
  %v641 = vmul.f32 %v477, %v640
  %v642 = vadd.f32 %v636, %v641
  %v643 = vlaneseq
  %v644 = vshrl.u32 %v643, 7
  %v645 = vsub.s32 3, %v644
  %v646 = vrot.slane %v317, %v645
  %v647 = vmul.f32 %v490, %v646
  %v648 = vadd.f32 %v642, %v647
  %v649 = vlaneseq
  %v650 = vshrl.u32 %v649, 7
  %v651 = vsub.s32 4, %v650
  %v652 = vrot.slane %v317, %v651
  %v653 = vmul.f32 %v503, %v652
  %v654 = vadd.f32 %v648, %v653
  %v655 = vlaneseq
  %v656 = vshrl.u32 %v655, 7
  %v657 = vsub.s32 5, %v656
  %v658 = vrot.slane %v317, %v657
  %v659 = vmul.f32 %v516, %v658
  %v660 = vadd.f32 %v654, %v659
  %v661 = vmul.f32 %v528, %v592
  %v662 = vadd.f32 %v366, %v661
  %v663 = vmul.f32 %v537, %v598
  %v664 = vadd.f32 %v662, %v663
  %v665 = vmul.f32 %v546, %v604
  %v666 = vadd.f32 %v664, %v665
  %v667 = vmul.f32 %v555, %v610
  %v668 = vadd.f32 %v666, %v667
  %v669 = vmul.f32 %v564, %v616
  %v670 = vadd.f32 %v668, %v669
  %v671 = vmul.f32 %v573, %v622
  %v672 = vadd.f32 %v670, %v671
  %v673 = vmul.f32 %v373, %v628
  %v674 = vadd.f32 %v672, %v673
  %v675 = vmul.f32 %v386, %v634
  %v676 = vadd.f32 %v674, %v675
  %v677 = vmul.f32 %v399, %v640
  %v678 = vadd.f32 %v676, %v677
  %v679 = vmul.f32 %v412, %v646
  %v680 = vadd.f32 %v678, %v679
  %v681 = vmul.f32 %v425, %v652
  %v682 = vadd.f32 %v680, %v681
  %v683 = vmul.f32 %v438, %v658
  %v684 = vadd.f32 %v682, %v683
  %v685 = vlaneseq
  %v686 = vshrl.u32 %v685, 7
  %v687 = vsub.s32 0, %v686
  %v688 = vrot.slane %v349, %v687
  %v689 = vmul.f32 %v329, %v688
  %v690 = vadd.f32 %v322, %v689
  %v691 = vlaneseq
  %v692 = vshrl.u32 %v691, 7
  %v693 = vsub.s32 1, %v692
  %v694 = vrot.slane %v349, %v693
  %v695 = vmul.f32 %v342, %v694
  %v696 = vadd.f32 %v690, %v695
  %v697 = vlaneseq
  %v698 = vshrl.u32 %v697, 7
  %v699 = vsub.s32 0, %v698
  %v700 = vrot.slane %v361, %v699
  %v701 = vmul.f32 %v329, %v700
  %v702 = vadd.f32 %v322, %v701
  %v703 = vlaneseq
  %v704 = vshrl.u32 %v703, 7
  %v705 = vsub.s32 1, %v704
  %v706 = vrot.slane %v361, %v705
  %v707 = vmul.f32 %v342, %v706
  %v708 = vadd.f32 %v702, %v707
  %v709 = vlaneseq
  %v710 = vshrl.u32 %v709, 7
  %v711 = vsub.s32 0, %v710
  %v712 = vrot.slane %v523, %v711
  %v713 = vmul.f32 %v329, %v712
  %v714 = vadd.f32 %v322, %v713
  %v715 = vlaneseq
  %v716 = vshrl.u32 %v715, 7
  %v717 = vsub.s32 1, %v716
  %v718 = vrot.slane %v523, %v717
  %v719 = vmul.f32 %v342, %v718
  %v720 = vadd.f32 %v714, %v719
  %s721 = scalar_lea.vmem %s5, 8
  %v722 = vld [vmem:[%s721] sm:$0x3]
  %724 = vset.pattern.permute.xlu0 0
  %725 = vperm.xlu0 %724, %v722
  %v726 = vpop.permute.xlu0 %725
  %v728 = vlaneseq
  %v729 = vshrl.u32 %v728, 7
  %v730 = vsub.s32 0, %v729
  %v731 = vrot.slane %v588, %v730
  %v732 = vmul.f32 %v726, %v731
  %v733 = vadd.f32 %v720, %v732
  %s734 = scalar_lea.vmem %s5, 10
  %v735 = vld [vmem:[%s734] sm:$0x3]
  %737 = vset.pattern.permute.xlu0 0
  %738 = vperm.xlu0 %737, %v735
  %v739 = vpop.permute.xlu0 %738
  %v741 = vlaneseq
  %v742 = vshrl.u32 %v741, 7
  %v743 = vsub.s32 1, %v742
  %v744 = vrot.slane %v588, %v743
  %v745 = vmul.f32 %v739, %v744
  %v746 = vadd.f32 %v733, %v745
  %v747 = vld [vmem:[%s5] sm:$0x3]
  %749 = vset.pattern.permute.xlu0 0
  %750 = vperm.xlu0 %749, %v747
  %v751 = vpop.permute.xlu0 %750
  %v753 = vmul.f32 %v751, %v712
  %v754 = vadd.f32 %v322, %v753
  %s755 = scalar_lea.vmem %s5, 2
  %v756 = vld [vmem:[%s755] sm:$0x3]
  %758 = vset.pattern.permute.xlu0 0
  %759 = vperm.xlu0 %758, %v756
  %v760 = vpop.permute.xlu0 %759
  %v762 = vmul.f32 %v760, %v718
  %v763 = vadd.f32 %v754, %v762
  %v764 = vmul.f32 %v329, %v731
  %v765 = vadd.f32 %v763, %v764
  %v766 = vmul.f32 %v342, %v744
  %v767 = vadd.f32 %v765, %v766
  %v768 = vlaneseq
  %v769 = vshrl.u32 %v768, 7
  %v770 = vsub.s32 0, %v769
  %v771 = vrot.slane %v660, %v770
  %v772 = vmul.f32 %v329, %v771
  %v773 = vadd.f32 %v322, %v772
  %v774 = vlaneseq
  %v775 = vshrl.u32 %v774, 7
  %v776 = vsub.s32 1, %v775
  %v777 = vrot.slane %v660, %v776
  %v778 = vmul.f32 %v342, %v777
  %v779 = vadd.f32 %v773, %v778
  %v780 = vlaneseq
  %v781 = vshrl.u32 %v780, 7
  %v782 = vsub.s32 0, %v781
  %v783 = vrot.slane %v684, %v782
  %v784 = vmul.f32 %v726, %v783
  %v785 = vadd.f32 %v779, %v784
  %v786 = vlaneseq
  %v787 = vshrl.u32 %v786, 7
  %v788 = vsub.s32 1, %v787
  %v789 = vrot.slane %v684, %v788
  %v790 = vmul.f32 %v739, %v789
  %v791 = vadd.f32 %v785, %v790
  %v792 = vmul.f32 %v751, %v771
  %v793 = vadd.f32 %v322, %v792
  %v794 = vmul.f32 %v760, %v777
  %v795 = vadd.f32 %v793, %v794
  %v796 = vmul.f32 %v329, %v783
  %v797 = vadd.f32 %v795, %v796
  %v798 = vmul.f32 %v342, %v789
  %v799 = vadd.f32 %v797, %v798
  %v801 = vrot.slane %v767, 6
  %v804 = vrot.slane %v791, 4
  %v807 = vrot.slane %v799, 2
  %vm809 = vcmask 1041408
  %v810 = vsel %vm809, %v746, %v801
  %vm811 = vcmask 1043456
  %v812 = vsel %vm811, %v810, %v804
  %vm813 = vcmask 1045504
  %v814 = vsel %vm813, %v812, %v807
  %v816 = vrot.slane %v696, 6
  %v819 = vrot.slane %v708, 4
  %v821 = vrot.slane %v708, 2
  %v823 = vsel %vm809, %v696, %v816
  %v824 = vsel %vm811, %v823, %v819
  %v825 = vsel %vm813, %v824, %v821
  %v826 = vmul.f32 %v825, 0.044715
  %v827 = vadd.f32 %v814, %v826
  %v828 = vmul.f32 %v827, 0.7978846
  %v829 = vtanh.pop %v828
  %v830 = vadd.f32 %v829, 1.0
  %v831 = vmul.f32 %v830, 0.5
  %v832 = vmul.f32 %v830, %v830
  %v833 = vmul.f32 %v832, %v830
  %v834 = vmul.f32 %v833, 0.044715
  %v835 = vadd.f32 %v832, %v834
  %v836 = vmul.f32 %v835, 0.7978846
  %v837 = vtanh.pop %v836
  %v838 = vadd.f32 %v837, 1.0
  %v839 = vmul.f32 %v831, %v838
  %v840 = vmul.f32 %v833, %v838
  %v841 = vmul.f32 %v840, 0.044715
  %v842 = vadd.f32 %v839, %v841
  %vm843 = vcmask 15360
  %844 = vst.msk [vmem:[%s9] sm:$0xff] %vm843, %v842
  %845 = vst.msk [vmem:[%s9 + $0x8] sm:$0xff] %vm843, %v839
  %846 = vst.msk [vmem:[%s9 + $0x10] sm:$0xff] %vm843, %v842
  // Predicated region
  $region38: #{model_forward.1} parent=0 // pred_check
    _
  $region39: #{model_forward.1} parent=0 // pred_check_branch
    %848 = sbr.rel (0) target = $region41
  $region40: #{model_forward.1} parent=0 // pred_region
    _
  $region41: #{model_forward.1} parent=0 // pred_fallthru
    _
  // Predicated region
  $region42: #{model_forward.1} parent=0 // pred_check
    _
  $region43: #{model_forward.1} parent=0 // pred_check_branch
    %850 = sbr.rel (0) target = $region45
  $region44: #{model_forward.1} parent=0 // pred_region
    _
  $region45: #{model_forward.1} parent=0 // pred_fallthru
    _

</llo_original>
